<compile_context>
chip_gen: v7x
topology: tpu7x:2x2x1
jax: 0.10.0
libtpu: 0.0.40
codegen_flags: <defaults>
</compile_context>

<pallas_src>
import jax
import jax.numpy as jnp
from jax.experimental import pallas as pl
from jax.experimental.pallas import tpu as pltpu


# ----------------------------- config ---------------------------------------
class Config:
    dim_z = 4
    dim_c = 3
    n_nodes = 32
    dim_x = 16
    dim_y = 16
    scale = 1.0


PACK = 4  # points packed along lanes; PACK * n_nodes(32) = 128 = full vreg lane width


# ----------------------------- coordinates (reference-only glue) ------------
def get_coordinates(dim_x, dim_y, scale=1.0, batch_size=1):
    # Same math as the torch helper; the (ones @ range) outer products are
    # written as exact broadcasts so the f32 reference is not at the mercy of
    # XLA's default matmul precision.
    n_points = dim_x * dim_y
    x_range = scale * (jnp.arange(dim_x, dtype=jnp.float32) - (dim_x - 1) / 2.0) / (dim_x - 1) / 0.5
    y_range = scale * (jnp.arange(dim_y, dtype=jnp.float32) - (dim_y - 1) / 2.0) / (dim_y - 1) / 0.5
    x_mat = jnp.broadcast_to(x_range[None, :], (dim_y, dim_x))
    y_mat = jnp.broadcast_to(y_range[:, None], (dim_y, dim_x))
    r_mat = jnp.sqrt(x_mat * x_mat + y_mat * y_mat)
    tile = lambda m: jnp.tile(m.reshape(-1), (batch_size,)).reshape(batch_size, n_points, 1)
    return tile(x_mat), tile(y_mat), tile(r_mat)


# ----------------------------- one-time parameter packing --------------------
def pack_cppn_params(params, config, *, pack=PACK, dtype=jnp.float32):
    """One-time packing of CPPN weights into lane-packed block-diagonal form.

    Call once, reuse the result across every forward call (this is the hoist
    of all kron / tile / stack work out of the per-call path).
    """
    eye = jnp.eye(pack, dtype=jnp.float32)
    w_xyz = jnp.concatenate([params["w_x"], params["w_y"], params["w_r"]], axis=1)  # (n, 3)
    packed = {
        "wz":   jnp.tile(params["w_z"], (pack, 1)).astype(dtype),                  # (H, dim_z)
        "wxyz": jnp.kron(eye, w_xyz).astype(dtype),                                 # (H, 3*pack)
        "w123": jnp.stack([jnp.kron(eye, params["w1"]),
                           jnp.kron(eye, params["w2"]),
                           jnp.kron(eye, params["w3"])]).astype(dtype),             # (3, H, H)
        "w4":   jnp.kron(eye, params["w4"]).astype(dtype),                          # (Cp, H)
        "b123": jnp.stack([jnp.tile(params["b1"], pack),
                           jnp.tile(params["b2"], pack),
                           jnp.tile(params["b3"], pack)])[:, :, None].astype(dtype),  # (3, H, 1)
        "b4":   jnp.tile(params["b4"], pack).reshape(-1, 1).astype(dtype),          # (Cp, 1)
    }
    return jax.tree_util.tree_map(jax.block_until_ready, packed)


# ----------------------------- Pallas kernel ---------------------------------
def _make_kernel(*, dim_x, dim_y, scale, pack, tc, n_sub, compute_dtype):
    """Builds the per-(batch, column-tile) kernel.

    Layout is transposed & lane-packed: columns are packed points (pack points
    per column), rows are features / hidden units.  All activations are
    (H, tc) with the big point dimension on lanes -> lane-dense compute and
    unmasked vector stores.
    """
    fp = 3 * pack                       # packed (x, y, r) feature rows
    sub_w = tc // n_sub
    cx = (dim_x - 1) / 2.0
    cy = (dim_y - 1) / 2.0

    def kernel(z_ref, wz_ref, wxyz_ref, w123_ref, w4_ref, b123_ref, b4_ref, out_ref):
        # Per-batch latent bias for layer 0:  tile_PACK(w_z @ (z * scale)).
        z_row = z_ref[0].astype(jnp.float32) * scale                                   # (1, dim_z)
        z_bias = (wz_ref[...].astype(jnp.float32) * z_row).sum(axis=1, keepdims=True)  # (H, 1)

        wxyz = wxyz_ref[...]
        w1, w2, w3 = w123_ref[0], w123_ref[1], w123_ref[2]
        w4 = w4_ref[...]
        b1 = b123_ref[0].astype(jnp.float32)
        b2 = b123_ref[1].astype(jnp.float32)
        b3 = b123_ref[2].astype(jnp.float32)
        b4 = b4_ref[...].astype(jnp.float32)

        col0 = pl.program_id(1) * tc                        # first packed column of this tile

        # Static unroll over independent sub-tiles: layer-k tanh (EUP) of one
        # sub-tile can overlap layer-k matmul (MXU) of the other.
        for s in range(n_sub):
            # ---- synthesize packed, transposed (x, y, r) features on the VPU ----
            row = jax.lax.broadcasted_iota(jnp.int32, (fp, sub_w), 0).astype(jnp.float32)
            lane = jax.lax.broadcasted_iota(jnp.int32, (fp, sub_w), 1).astype(jnp.float32)
            p = jnp.floor(row / 3.0)                        # pack slot within a column
            f = row - 3.0 * p                               # 0:x  1:y  2:r
            base = ((col0 + s * sub_w) * pack).astype(jnp.float32)
            pt = base + lane * float(pack) + p              # point index within the image (exact f32)
            py = jnp.floor(pt / float(dim_x))               # pixel row (exact for these ranges)
            px = pt - py * float(dim_x)                     # pixel col
            xv = scale * (px - cx) / float(dim_x - 1) / 0.5
            yv = scale * (py - cy) / float(dim_y - 1) / 0.5
            rv = jnp.sqrt(xv * xv + yv * yv)
            feat = jnp.where(f < 0.5, xv, jnp.where(f < 1.5, yv, rv)).astype(compute_dtype)

            # ---- 5 layers: MXU dots (f32 accumulation), tanh/sigmoid in f32 ----
            h = jnp.tanh(jnp.dot(wxyz, feat, preferred_element_type=jnp.float32) + z_bias)   # Tanh 1
            h = jnp.tanh(jnp.dot(w1, h.astype(compute_dtype),
                                 preferred_element_type=jnp.float32) + b1)                    # Tanh 2
            h = jnp.tanh(jnp.dot(w2, h.astype(compute_dtype),
                                 preferred_element_type=jnp.float32) + b2)                    # Tanh 3
            h = jnp.tanh(jnp.dot(w3, h.astype(compute_dtype),
                                 preferred_element_type=jnp.float32) + b3)                    # Tanh 4
            o = jnp.dot(w4, h.astype(compute_dtype), preferred_element_type=jnp.float32) + b4
            out_ref[0, :, s * sub_w:(s + 1) * sub_w] = jax.nn.sigmoid(o)                      # head

    return kernel


# ----------------------------- forward builder --------------------------------
def make_cppn_forward(packed, config, *, pack=PACK, compute_dtype=jnp.float32,
                      tile_cols=8192, packed_output=False):
    dim_x, dim_y = config.dim_x, config.dim_y
    dim_z, dim_c, n_nodes = config.dim_z, config.dim_c, config.n_nodes
    n_points = dim_x * dim_y
    H, Cp, fp = pack * n_nodes, pack * dim_c, 3 * pack
    M = -(-n_points // pack)                         # packed columns per image

    wz, wxyz, w123, w4 = packed["wz"], packed["wxyz"], packed["w123"], packed["w4"]
    b123, b4 = packed["b123"], packed["b4"]

    def forward(z):
        B = z.shape[0]
        z3 = z.astype(jnp.float32).reshape(B, 1, dim_z)

        # Trace-time tile selection: single tile for small images, 128-aligned
        # lane-dense slabs otherwise; ensure >= 2 parallel steps when B == 1.
        if M <= tile_cols:
            tc = M
            if B == 1 and M >= 256:                  # keep both v7x TensorCores busy
                tc = max(128, ((M // 2) // 128) * 128)
        else:
            tc = max(128, (tile_cols // 128) * 128)
        grid_cols = -(-M // tc)
        n_sub = 2 if (tc >= 512 and tc % 2 == 0) else 1

        kernel = _make_kernel(dim_x=dim_x, dim_y=dim_y, scale=config.scale,
                              pack=pack, tc=tc, n_sub=n_sub,
                              compute_dtype=compute_dtype)

        const2 = lambda b, j: (0, 0)
        const3 = lambda b, j: (0, 0, 0)

        out_t = pl.pallas_call(
            kernel,
            out_shape=jax.ShapeDtypeStruct((B, Cp, M), jnp.float32),
            grid_spec=pltpu.PrefetchScalarGridSpec(
                num_scalar_prefetch=0,
                grid=(B, grid_cols),
                in_specs=[
                    pl.BlockSpec((1, 1, dim_z), lambda b, j: (b, 0, 0)),   # z (per batch)
                    pl.BlockSpec((H, dim_z), const2),                      # tiled w_z
                    pl.BlockSpec((H, fp), const2),                         # block-diag [w_x|w_y|w_r]
                    pl.BlockSpec((3, H, H), const3),                       # block-diag w1..w3
                    pl.BlockSpec((Cp, H), const2),                         # block-diag w4
                    pl.BlockSpec((3, H, 1), const3),                       # tiled b1..b3
                    pl.BlockSpec((Cp, 1), const2),                         # tiled b4
                ],
                out_specs=pl.BlockSpec((1, Cp, tc), lambda b, j: (b, 0, j)),
            ),
            compiler_params=pltpu.CompilerParams(
                dimension_semantics=("parallel", "parallel")),
        )(z3, wz, wxyz, w123, w4, b123, b4)

        if packed_output:
            return out_t                              # (B, Cp, M) lane-dense packed layout
        out = jnp.transpose(out_t, (0, 2, 1)).reshape(B, M * pack, dim_c)
        return out[:, :n_points]

    return jax.jit(forward)


# ----------------------------- params (deterministic init) -------------------
def init_params(key, config):
    # weights_init: all Linear weights ~ N(0, 1), biases = 0 (torch W is (out, in)).
    dim_z, dim_c, n = config.dim_z, config.dim_c, config.n_nodes
    ks = jax.random.split(key, 8)
    return {
        "w_z": jax.random.normal(ks[0], (n, dim_z), jnp.float32),
        "w_x": jax.random.normal(ks[1], (n, 1), jnp.float32),
        "w_y": jax.random.normal(ks[2], (n, 1), jnp.float32),
        "w_r": jax.random.normal(ks[3], (n, 1), jnp.float32),
        "w1": jax.random.normal(ks[4], (n, n), jnp.float32),
        "b1": jnp.zeros((n,), jnp.float32),
        "w2": jax.random.normal(ks[5], (n, n), jnp.float32),
        "b2": jnp.zeros((n,), jnp.float32),
        "w3": jax.random.normal(ks[6], (n, n), jnp.float32),
        "b3": jnp.zeros((n,), jnp.float32),
        "w4": jax.random.normal(ks[7], (dim_c, n), jnp.float32),
        "b4": jnp.zeros((dim_c,), jnp.float32),
    }


# ----------------------------- reference (plain JAX) --------------------------
def cppn_reference(z, params, config):
    batch_size = z.shape[0]
    n_points = config.dim_x * config.dim_y
    x, y, r = get_coordinates(config.dim_x, config.dim_y, config.scale, batch_size)
    z_scaled = (z.reshape(batch_size, 1, config.dim_z)
                * jnp.ones((n_points, 1), jnp.float32) * config.scale)
    u = (z_scaled @ params["w_z"].T + x @ params["w_x"].T
         + y @ params["w_y"].T + r @ params["w_r"].T)
    u = jnp.tanh(u)
    u = jnp.tanh(u @ params["w1"].T + params["b1"])
    u = jnp.tanh(u @ params["w2"].T + params["b2"])
    u = jnp.tanh(u @ params["w3"].T + params["b3"])
    u = jax.nn.sigmoid(u @ params["w4"].T + params["b4"])
    return u


# ----------------------------- main ------------------------------------------
if __name__ == "__main__":
    config = Config()
    key = jax.random.PRNGKey(0)
    k_param, k_z = jax.random.split(key)
    params = init_params(k_param, config)

    batch = 2
    z = jax.random.normal(k_z, (batch, config.dim_z), jnp.float32)
    ref = cppn_reference(z, params, config)

    # f32 / PACK=4: exact-fit 128-wide blocks (v5e MXU); strict reference check.
    packed4 = pack_cppn_params(params, config, pack=4, dtype=jnp.float32)
    cppn_f32 = make_cppn_forward(packed4, config, pack=4, compute_dtype=jnp.float32)
    out = jax.block_until_ready(cppn_f32(z))
    assert out.shape == (batch, config.dim_x * config.dim_y, config.dim_c), out.shape
    assert jnp.allclose(out, ref, atol=1e-5, rtol=1e-5), float(jnp.max(jnp.abs(out - ref)))

    # bf16 / PACK=8: fills the 256-wide MXU on v6e/v7x; loose tolerance (bf16 weights).
    packed8 = pack_cppn_params(params, config, pack=8, dtype=jnp.bfloat16)
    cppn_bf16 = make_cppn_forward(packed8, config, pack=8, compute_dtype=jnp.bfloat16)
    out_bf16 = jax.block_until_ready(cppn_bf16(z))
    assert out_bf16.shape == out.shape, out_bf16.shape
    assert float(jnp.max(jnp.abs(out_bf16 - ref))) < 0.25, float(jnp.max(jnp.abs(out_bf16 - ref)))

    print("KERNEL_OK")
</pallas_src>

<mosaic_0001>
module attributes {stable_mosaic.version = 11 : i64} {
  func.func @kernel(%arg0: i32, %arg1: i32, %arg2: memref<1x1x4xf32, #tpu.memory_space<vmem>>, %arg3: memref<128x4xf32, #tpu.memory_space<vmem>>, %arg4: memref<128x12xf32, #tpu.memory_space<vmem>>, %arg5: memref<3x128x128xf32, #tpu.memory_space<vmem>>, %arg6: memref<12x128xf32, #tpu.memory_space<vmem>>, %arg7: memref<3x128x1xf32, #tpu.memory_space<vmem>>, %arg8: memref<12x1xf32, #tpu.memory_space<vmem>>, %arg9: memref<1x12x64xf32, #tpu.memory_space<vmem>>) attributes {dimension_semantics = [#tpu.dimension_semantics<parallel>, #tpu.dimension_semantics<parallel>], iteration_bounds = array<i64: 2, 1>, scalar_prefetch = 0 : i64, scratch_operands = 0 : i64, tpu.core_type = #tpu.core_type<tc>, window_params = [{transform_indices = @transform_0, window_bounds = array<i64: 1, 1, 4>}, {pipeline_mode = #tpu.pipeline_mode<synchronous>, transform_indices = @transform_1, window_bounds = array<i64: 128, 4>}, {pipeline_mode = #tpu.pipeline_mode<synchronous>, transform_indices = @transform_2, window_bounds = array<i64: 128, 12>}, {pipeline_mode = #tpu.pipeline_mode<synchronous>, transform_indices = @transform_3, window_bounds = array<i64: 3, 128, 128>}, {pipeline_mode = #tpu.pipeline_mode<synchronous>, transform_indices = @transform_4, window_bounds = array<i64: 12, 128>}, {pipeline_mode = #tpu.pipeline_mode<synchronous>, transform_indices = @transform_5, window_bounds = array<i64: 3, 128, 1>}, {pipeline_mode = #tpu.pipeline_mode<synchronous>, transform_indices = @transform_6, window_bounds = array<i64: 12, 1>}, {transform_indices = @transform_7, window_bounds = array<i64: 1, 12, 64>}]} {
    %c0 = arith.constant 0 : index
    %c0_0 = arith.constant 0 : index
    %c0_1 = arith.constant 0 : index
    %0 = vector.load %arg2[%c0, %c0_0, %c0_1] : memref<1x1x4xf32, #tpu.memory_space<vmem>>, vector<1x1x4xf32>
    %1 = vector.shape_cast %0 : vector<1x1x4xf32> to vector<1x4xf32>
    %cst = arith.constant 1.000000e+00 : f32
    %2 = vector.broadcast %cst : f32 to vector<1x4xf32>
    %3 = arith.mulf %1, %2 : vector<1x4xf32>
    %c0_2 = arith.constant 0 : index
    %c0_3 = arith.constant 0 : index
    %4 = vector.load %arg3[%c0_2, %c0_3] : memref<128x4xf32, #tpu.memory_space<vmem>>, vector<128x4xf32>
    %5 = vector.broadcast %3 : vector<1x4xf32> to vector<128x4xf32>
    %6 = arith.mulf %4, %5 : vector<128x4xf32>
    %cst_4 = arith.constant dense<0.000000e+00> : vector<128xf32>
    %7 = vector.multi_reduction <add>, %6, %cst_4 [1] : vector<128x4xf32> to vector<128xf32>
    %8 = vector.shape_cast %7 : vector<128xf32> to vector<128x1xf32>
    %c0_5 = arith.constant 0 : index
    %c0_6 = arith.constant 0 : index
    %9 = vector.load %arg4[%c0_5, %c0_6] : memref<128x12xf32, #tpu.memory_space<vmem>>, vector<128x12xf32>
    %c0_7 = arith.constant 0 : index
    %c0_8 = arith.constant 0 : index
    %c0_9 = arith.constant 0 : index
    %10 = vector.load %arg5[%c0_7, %c0_8, %c0_9] : memref<3x128x128xf32, #tpu.memory_space<vmem>>, vector<1x128x128xf32>
    %11 = vector.shape_cast %10 : vector<1x128x128xf32> to vector<128x128xf32>
    %c1 = arith.constant 1 : index
    %c0_10 = arith.constant 0 : index
    %c0_11 = arith.constant 0 : index
    %12 = vector.load %arg5[%c1, %c0_10, %c0_11] : memref<3x128x128xf32, #tpu.memory_space<vmem>>, vector<1x128x128xf32>
    %13 = vector.shape_cast %12 : vector<1x128x128xf32> to vector<128x128xf32>
    %c2 = arith.constant 2 : index
    %c0_12 = arith.constant 0 : index
    %c0_13 = arith.constant 0 : index
    %14 = vector.load %arg5[%c2, %c0_12, %c0_13] : memref<3x128x128xf32, #tpu.memory_space<vmem>>, vector<1x128x128xf32>
    %15 = vector.shape_cast %14 : vector<1x128x128xf32> to vector<128x128xf32>
    %c0_14 = arith.constant 0 : index
    %c0_15 = arith.constant 0 : index
    %16 = vector.load %arg6[%c0_14, %c0_15] : memref<12x128xf32, #tpu.memory_space<vmem>>, vector<12x128xf32>
    %c0_16 = arith.constant 0 : index
    %c0_17 = arith.constant 0 : index
    %c0_18 = arith.constant 0 : index
    %17 = vector.load %arg7[%c0_16, %c0_17, %c0_18] : memref<3x128x1xf32, #tpu.memory_space<vmem>>, vector<1x128x1xf32>
    %18 = vector.shape_cast %17 : vector<1x128x1xf32> to vector<128x1xf32>
    %c1_19 = arith.constant 1 : index
    %c0_20 = arith.constant 0 : index
    %c0_21 = arith.constant 0 : index
    %19 = vector.load %arg7[%c1_19, %c0_20, %c0_21] : memref<3x128x1xf32, #tpu.memory_space<vmem>>, vector<1x128x1xf32>
    %20 = vector.shape_cast %19 : vector<1x128x1xf32> to vector<128x1xf32>
    %c2_22 = arith.constant 2 : index
    %c0_23 = arith.constant 0 : index
    %c0_24 = arith.constant 0 : index
    %21 = vector.load %arg7[%c2_22, %c0_23, %c0_24] : memref<3x128x1xf32, #tpu.memory_space<vmem>>, vector<1x128x1xf32>
    %22 = vector.shape_cast %21 : vector<1x128x1xf32> to vector<128x1xf32>
    %c0_25 = arith.constant 0 : index
    %c0_26 = arith.constant 0 : index
    %23 = vector.load %arg8[%c0_25, %c0_26] : memref<12x1xf32, #tpu.memory_space<vmem>>, vector<12x1xf32>
    %c64_i32 = arith.constant 64 : i32
    %24 = arith.muli %arg1, %c64_i32 : i32
    %25 = tpu.iota {dimensions = array<i32: 0>} : vector<12x64xi32>
    %26 = arith.sitofp %25 : vector<12x64xi32> to vector<12x64xf32>
    %27 = tpu.iota {dimensions = array<i32: 1>} : vector<12x64xi32>
    %28 = arith.sitofp %27 : vector<12x64xi32> to vector<12x64xf32>
    %cst_27 = arith.constant 3.000000e+00 : f32
    %29 = vector.broadcast %cst_27 : f32 to vector<12x64xf32>
    %30 = arith.divf %26, %29 : vector<12x64xf32>
    %31 = math.floor %30 : vector<12x64xf32>
    %cst_28 = arith.constant 3.000000e+00 : f32
    %32 = vector.broadcast %cst_28 : f32 to vector<12x64xf32>
    %33 = arith.mulf %32, %31 : vector<12x64xf32>
    %34 = arith.subf %26, %33 : vector<12x64xf32>
    %c0_i32 = arith.constant 0 : i32
    %35 = arith.addi %24, %c0_i32 : i32
    %c4_i32 = arith.constant 4 : i32
    %36 = arith.muli %35, %c4_i32 : i32
    %37 = arith.sitofp %36 : i32 to f32
    %cst_29 = arith.constant 4.000000e+00 : f32
    %38 = vector.broadcast %cst_29 : f32 to vector<12x64xf32>
    %39 = arith.mulf %28, %38 : vector<12x64xf32>
    %40 = vector.broadcast %37 : f32 to vector<12x64xf32>
    %41 = arith.addf %40, %39 : vector<12x64xf32>
    %42 = arith.addf %41, %31 : vector<12x64xf32>
    %cst_30 = arith.constant 1.600000e+01 : f32
    %43 = vector.broadcast %cst_30 : f32 to vector<12x64xf32>
    %44 = arith.divf %42, %43 : vector<12x64xf32>
    %45 = math.floor %44 : vector<12x64xf32>
    %cst_31 = arith.constant 1.600000e+01 : f32
    %46 = vector.broadcast %cst_31 : f32 to vector<12x64xf32>
    %47 = arith.mulf %45, %46 : vector<12x64xf32>
    %48 = arith.subf %42, %47 : vector<12x64xf32>
    %cst_32 = arith.constant 7.500000e+00 : f32
    %49 = vector.broadcast %cst_32 : f32 to vector<12x64xf32>
    %50 = arith.subf %48, %49 : vector<12x64xf32>
    %cst_33 = arith.constant 1.000000e+00 : f32
    %51 = vector.broadcast %cst_33 : f32 to vector<12x64xf32>
    %52 = arith.mulf %51, %50 : vector<12x64xf32>
    %cst_34 = arith.constant 1.500000e+01 : f32
    %53 = vector.broadcast %cst_34 : f32 to vector<12x64xf32>
    %54 = arith.divf %52, %53 : vector<12x64xf32>
    %cst_35 = arith.constant 5.000000e-01 : f32
    %55 = vector.broadcast %cst_35 : f32 to vector<12x64xf32>
    %56 = arith.divf %54, %55 : vector<12x64xf32>
    %cst_36 = arith.constant 7.500000e+00 : f32
    %57 = vector.broadcast %cst_36 : f32 to vector<12x64xf32>
    %58 = arith.subf %45, %57 : vector<12x64xf32>
    %cst_37 = arith.constant 1.000000e+00 : f32
    %59 = vector.broadcast %cst_37 : f32 to vector<12x64xf32>
    %60 = arith.mulf %59, %58 : vector<12x64xf32>
    %cst_38 = arith.constant 1.500000e+01 : f32
    %61 = vector.broadcast %cst_38 : f32 to vector<12x64xf32>
    %62 = arith.divf %60, %61 : vector<12x64xf32>
    %cst_39 = arith.constant 5.000000e-01 : f32
    %63 = vector.broadcast %cst_39 : f32 to vector<12x64xf32>
    %64 = arith.divf %62, %63 : vector<12x64xf32>
    %65 = arith.mulf %56, %56 : vector<12x64xf32>
    %66 = arith.mulf %64, %64 : vector<12x64xf32>
    %67 = arith.addf %65, %66 : vector<12x64xf32>
    %68 = math.sqrt %67 : vector<12x64xf32>
    %cst_40 = arith.constant 5.000000e-01 : f32
    %69 = vector.broadcast %cst_40 : f32 to vector<12x64xf32>
    %70 = arith.cmpf olt, %34, %69 : vector<12x64xf32>
    %cst_41 = arith.constant 1.500000e+00 : f32
    %71 = vector.broadcast %cst_41 : f32 to vector<12x64xf32>
    %72 = arith.cmpf olt, %34, %71 : vector<12x64xf32>
    %73 = arith.select %72, %64, %68 : vector<12x64xi1>, vector<12x64xf32>
    %74 = arith.select %70, %56, %73 : vector<12x64xi1>, vector<12x64xf32>
    %cst_42 = arith.constant dense<0.000000e+00> : vector<128x64xf32>
    %75 = tpu.matmul %9, %74, %cst_42 {dimension_numbers = #tpu.dot_dimension_numbers<[1], [0], [0], [1], [0, 0, 1, 1], [], []>} : vector<128x12xf32>, vector<12x64xf32>, vector<128x64xf32> -> vector<128x64xf32>
    %76 = vector.broadcast %8 : vector<128x1xf32> to vector<128x64xf32>
    %77 = arith.addf %75, %76 : vector<128x64xf32>
    %78 = math.tanh %77 : vector<128x64xf32>
    %cst_43 = arith.constant dense<0.000000e+00> : vector<128x64xf32>
    %79 = tpu.matmul %11, %78, %cst_43 {dimension_numbers = #tpu.dot_dimension_numbers<[1], [0], [0], [1], [0, 0, 1, 1], [], []>} : vector<128x128xf32>, vector<128x64xf32>, vector<128x64xf32> -> vector<128x64xf32>
    %80 = vector.broadcast %18 : vector<128x1xf32> to vector<128x64xf32>
    %81 = arith.addf %79, %80 : vector<128x64xf32>
    %82 = math.tanh %81 : vector<128x64xf32>
    %cst_44 = arith.constant dense<0.000000e+00> : vector<128x64xf32>
    %83 = tpu.matmul %13, %82, %cst_44 {dimension_numbers = #tpu.dot_dimension_numbers<[1], [0], [0], [1], [0, 0, 1, 1], [], []>} : vector<128x128xf32>, vector<128x64xf32>, vector<128x64xf32> -> vector<128x64xf32>
    %84 = vector.broadcast %20 : vector<128x1xf32> to vector<128x64xf32>
    %85 = arith.addf %83, %84 : vector<128x64xf32>
    %86 = math.tanh %85 : vector<128x64xf32>
    %cst_45 = arith.constant dense<0.000000e+00> : vector<128x64xf32>
    %87 = tpu.matmul %15, %86, %cst_45 {dimension_numbers = #tpu.dot_dimension_numbers<[1], [0], [0], [1], [0, 0, 1, 1], [], []>} : vector<128x128xf32>, vector<128x64xf32>, vector<128x64xf32> -> vector<128x64xf32>
    %88 = vector.broadcast %22 : vector<128x1xf32> to vector<128x64xf32>
    %89 = arith.addf %87, %88 : vector<128x64xf32>
    %90 = math.tanh %89 : vector<128x64xf32>
    %cst_46 = arith.constant dense<0.000000e+00> : vector<12x64xf32>
    %91 = tpu.matmul %16, %90, %cst_46 {dimension_numbers = #tpu.dot_dimension_numbers<[1], [0], [0], [1], [0, 0, 1, 1], [], []>} : vector<12x128xf32>, vector<128x64xf32>, vector<12x64xf32> -> vector<12x64xf32>
    %92 = vector.broadcast %23 : vector<12x1xf32> to vector<12x64xf32>
    %93 = arith.addf %91, %92 : vector<12x64xf32>
    %94 = arith.negf %93 : vector<12x64xf32>
    %95 = math.exp %94 : vector<12x64xf32>
    %cst_47 = arith.constant 1.000000e+00 : f32
    %96 = vector.broadcast %cst_47 : f32 to vector<12x64xf32>
    %97 = arith.addf %96, %95 : vector<12x64xf32>
    %98 = arith.divf %96, %97 : vector<12x64xf32>
    %c0_48 = arith.constant 0 : index
    %c0_49 = arith.constant 0 : index
    %c0_50 = arith.constant 0 : index
    %99 = vector.load %arg9[%c0_48, %c0_49, %c0_50] : memref<1x12x64xf32, #tpu.memory_space<vmem>>, vector<1x12x64xf32>
    %100 = vector.shape_cast %99 : vector<1x12x64xf32> to vector<12x64xf32>
    %101 = vector.shape_cast %98 : vector<12x64xf32> to vector<1x12x64xf32>
    tpu.vector_store %arg9[%c0_48, %c0_49, %c0_50], %101 {strides = array<i32>} : memref<1x12x64xf32, #tpu.memory_space<vmem>>, vector<1x12x64xf32>,
    return
  }
  func.func @transform_0(%arg0: i32, %arg1: i32) -> (i32, i32, i32) {
    %c0_i32 = arith.constant 0 : i32
    %c0_i32_0 = arith.constant 0 : i32
    %c0_i32_1 = arith.constant 0 : i32
    return %arg0, %c0_i32, %c0_i32_0 : i32, i32, i32
  }
  func.func @transform_1(%arg0: i32, %arg1: i32) -> (i32, i32) {
    %c0_i32 = arith.constant 0 : i32
    %c0_i32_0 = arith.constant 0 : i32
    %c0_i32_1 = arith.constant 0 : i32
    return %c0_i32, %c0_i32_0 : i32, i32
  }
  func.func @transform_2(%arg0: i32, %arg1: i32) -> (i32, i32) {
    %c0_i32 = arith.constant 0 : i32
    %c0_i32_0 = arith.constant 0 : i32
    %c0_i32_1 = arith.constant 0 : i32
    return %c0_i32, %c0_i32_0 : i32, i32
  }
  func.func @transform_3(%arg0: i32, %arg1: i32) -> (i32, i32, i32) {
    %c0_i32 = arith.constant 0 : i32
    %c0_i32_0 = arith.constant 0 : i32
    %c0_i32_1 = arith.constant 0 : i32
    %c0_i32_2 = arith.constant 0 : i32
    return %c0_i32, %c0_i32_0, %c0_i32_1 : i32, i32, i32
  }
  func.func @transform_4(%arg0: i32, %arg1: i32) -> (i32, i32) {
    %c0_i32 = arith.constant 0 : i32
    %c0_i32_0 = arith.constant 0 : i32
    %c0_i32_1 = arith.constant 0 : i32
    return %c0_i32, %c0_i32_0 : i32, i32
  }
  func.func @transform_5(%arg0: i32, %arg1: i32) -> (i32, i32, i32) {
    %c0_i32 = arith.constant 0 : i32
    %c0_i32_0 = arith.constant 0 : i32
    %c0_i32_1 = arith.constant 0 : i32
    %c0_i32_2 = arith.constant 0 : i32
    return %c0_i32, %c0_i32_0, %c0_i32_1 : i32, i32, i32
  }
  func.func @transform_6(%arg0: i32, %arg1: i32) -> (i32, i32) {
    %c0_i32 = arith.constant 0 : i32
    %c0_i32_0 = arith.constant 0 : i32
    %c0_i32_1 = arith.constant 0 : i32
    return %c0_i32, %c0_i32_0 : i32, i32
  }
  func.func @transform_7(%arg0: i32, %arg1: i32) -> (i32, i32, i32) {
    %c0_i32 = arith.constant 0 : i32
    %c0_i32_0 = arith.constant 0 : i32
    return %arg0, %c0_i32, %arg1 : i32, i32, i32
  }
}

</mosaic_0001>

<llo_original>
// kernel: forward.1
$region0: #{forward.1}
  #allocation0 [shape = 'u32[]', space=smem, size = 0x4, offset = 0x4, fixed_abs, tag = 'smem constant byte address 0x4 - core index']
  #allocation1 [shape = 'u32[144,128]{1,0:T(1,128)}', space=vmem, size = 0x12000, scoped, tag = 'internal scratch']
  %s0 = inlined_call_operand.vmem [shape: f32[2,1,4], index: 0, kind: input, shape index: {}]
  %s1 = inlined_call_operand.hbm [shape: f32[128,4], index: 1, kind: input, shape index: {}]
  %s2 = inlined_call_operand.hbm [shape: f32[128,12], index: 2, kind: input, shape index: {}]
  %s3 = inlined_call_operand.vmem [shape: f32[3,128,128], index: 3, kind: input, shape index: {}]
  %s4 = inlined_call_operand.vmem [shape: f32[12,128], index: 4, kind: input, shape index: {}]
  %s5 = inlined_call_operand.vmem [shape: f32[3,128,1], index: 5, kind: input, shape index: {}]
  %s6 = inlined_call_operand.vmem [shape: f32[12,1], index: 6, kind: input, shape index: {}]
  %s7 = inlined_call_operand.vmem [shape: f32[2,12,64], index: 7, kind: output, shape index: {}]
  %s8 = sld [smem:[#allocation0]]
  $region69: #{forward.1} parent=0
    _
  %s10 = ssub.s32 1, %s8
  %s11 = scalar_select 0, %s10, %s8
  $region1: #{forward.1} parent=0
    #allocation2 [shape = 'u8[65536]{0}', space=vmem, size = 0x10000, scoped, tag = 'input window, operand 1, single buffered']
    #allocation3 [shape = 's32[2]{0}', space=sflag, size = 0x8, scoped, tag = 'scoped memory for forward.1']
    #allocation4 [shape = 'u8[65536]{0}', space=vmem, size = 0x10000, scoped, tag = 'input window, operand 2, single buffered']
    #allocation5 [shape = 's32[1]{0}', space=sflag, size = 0x4, scoped, tag = 'scoped memory for forward.1']
    %12 = vsyncpa [#allocation3], 0
    %13 = vsyncpa [#allocation5], 0
    loop: start=0, step=1, limit=4
    $region2: #{forward.1} parent=1 // loop_pre_header
      _
    $region3: #{forward.1} parent=1 // loop_header
      %s15 = sphi 0, %s19
      %p16 = scmp.ge.s32.totalorder %s15, 4
      %s22 = sphi 0, %s34
      %s23 = sphi 0, %s30
      %s24 = sphi 0, %s22
      %s25 = sphi 0, %s23
      %s26 = sphi 0, %s24
      %s27 = sphi 0, %s25
      %s37 = sphi 0, %s39
      %s40 = sphi 0, %s37
      %s41 = sphi 0, %s40
      %s57 = sphi 0, %s41
      %s61 = sphi 0, %s61
      %s63 = sphi 0, %s61
      %s64 = sphi 0, %s63
      %s78 = sphi 0, %s64
      %s82 = sphi 0, %s82
      %s84 = sphi 0, %s82
      %s85 = sphi 0, %s84
      %s99 = sphi 0, %s85
      %s103 = sphi 0, %s103
      %s105 = sphi 0, %s103
      %s106 = sphi 0, %s105
      %s120 = sphi 0, %s106
      %s124 = sphi 0, %s124
      %s126 = sphi 0, %s124
      %s127 = sphi 0, %s126
      %s141 = sphi 0, %s127
      %s145 = sphi 0, %s145
      %s147 = sphi 0, %s145
      %s148 = sphi 0, %s147
      %s162 = sphi 0, %s148
      %s166 = sphi 0, %s166
      %s168 = sphi 0, %s166
      %s169 = sphi 0, %s168
      %s183 = sphi 0, %s169
      %s191 = sphi 0, %s193
      %s194 = sphi 0, %s191
      %s195 = sphi 0, %s194
      %s211 = sphi 0, %s195
    $region4: #{forward.1} parent=1 // loop_header_branch
      %18 = sbr.rel (%p16) target = $region8
    $region5: #{forward.1} parent=1 // loop_body
      %s20 = ssub.s32 %s15, 1
      %s21 = ssub.s32 %s15, 2
      %s28 = sadd.s32 1, %s23
      %p29 = scmp.ge.s32.totalorder %s28, 1
      %s30 = scalar_select %p29, 0, %s28
      %s31 = sadd.s32 1, %s22
      %s32 = scalar_select %p29, %s31, %s22
      %p33 = scmp.ge.s32.totalorder %s32, 2
      %s34 = scalar_select %p33, 0, %s32
      %s35 = ssub.s32 %s22, %s34
      %p36 = scmp.eq.s32.totalorder %s35, 0
      %s38 = sadd.s32 %s37, 1
      %s39 = scalar_select %p36, %s37, %s38
      %p42 = pneg %p36
      %p43 = scmp.eq.s32.totalorder %s15, 1
      %p44 = por %p42, %p43
      %p45 = scmp.ne.s32.totalorder %s37, %s40
      %p46 = scmp.eq.s32.totalorder %s15, 0
      %p47 = por %p45, %p46
      %p48 = scmp.ne.s32.totalorder %s37, %s40
      %p49 = scmp.eq.s32.totalorder %s20, 1
      %p50 = por %p48, %p49
      %p51 = scmp.ne.s32.totalorder %s40, %s41
      %p52 = scmp.eq.s32.totalorder %s20, 0
      %p53 = por %p51, %p52
      %p54 = scmp.ne.s32.totalorder %s40, %s41
      %p55 = scmp.eq.s32.totalorder %s21, 1
      %p56 = por %p54, %p55
      %p58 = scmp.ne.s32.totalorder %s41, %s57
      %p59 = scmp.eq.s32.totalorder %s21, 0
      %p60 = por %p58, %p59
      %s62 = sadd.s32 %s61, 1
      %p65 = scmp.eq.s32.totalorder %s15, 1
      %p66 = scmp.ne.s32.totalorder %s61, %s63
      %p67 = scmp.eq.s32.totalorder %s15, 0
      %p68 = por %p66, %p67
      %p69 = scmp.ne.s32.totalorder %s61, %s63
      %p70 = scmp.eq.s32.totalorder %s20, 1
      %p71 = por %p69, %p70
      %p72 = scmp.ne.s32.totalorder %s63, %s64
      %p73 = scmp.eq.s32.totalorder %s20, 0
      %p74 = por %p72, %p73
      %p75 = scmp.ne.s32.totalorder %s63, %s64
      %p76 = scmp.eq.s32.totalorder %s21, 1
      %p77 = por %p75, %p76
      %p79 = scmp.ne.s32.totalorder %s64, %s78
      %p80 = scmp.eq.s32.totalorder %s21, 0
      %p81 = por %p79, %p80
      %s83 = sadd.s32 %s82, 1
      %p86 = scmp.eq.s32.totalorder %s15, 1
      %p87 = scmp.ne.s32.totalorder %s82, %s84
      %p88 = scmp.eq.s32.totalorder %s15, 0
      %p89 = por %p87, %p88
      %p90 = scmp.ne.s32.totalorder %s82, %s84
      %p91 = scmp.eq.s32.totalorder %s20, 1
      %p92 = por %p90, %p91
      %p93 = scmp.ne.s32.totalorder %s84, %s85
      %p94 = scmp.eq.s32.totalorder %s20, 0
      %p95 = por %p93, %p94
      %p96 = scmp.ne.s32.totalorder %s84, %s85
      %p97 = scmp.eq.s32.totalorder %s21, 1
      %p98 = por %p96, %p97
      %p100 = scmp.ne.s32.totalorder %s85, %s99
      %p101 = scmp.eq.s32.totalorder %s21, 0
      %p102 = por %p100, %p101
      %s104 = sadd.s32 %s103, 1
      %p107 = scmp.eq.s32.totalorder %s15, 1
      %p108 = scmp.ne.s32.totalorder %s103, %s105
      %p109 = scmp.eq.s32.totalorder %s15, 0
      %p110 = por %p108, %p109
      %p111 = scmp.ne.s32.totalorder %s103, %s105
      %p112 = scmp.eq.s32.totalorder %s20, 1
      %p113 = por %p111, %p112
      %p114 = scmp.ne.s32.totalorder %s105, %s106
      %p115 = scmp.eq.s32.totalorder %s20, 0
      %p116 = por %p114, %p115
      %p117 = scmp.ne.s32.totalorder %s105, %s106
      %p118 = scmp.eq.s32.totalorder %s21, 1
      %p119 = por %p117, %p118
      %p121 = scmp.ne.s32.totalorder %s106, %s120
      %p122 = scmp.eq.s32.totalorder %s21, 0
      %p123 = por %p121, %p122
      %s125 = sadd.s32 %s124, 1
      %p128 = scmp.eq.s32.totalorder %s15, 1
      %p129 = scmp.ne.s32.totalorder %s124, %s126
      %p130 = scmp.eq.s32.totalorder %s15, 0
      %p131 = por %p129, %p130
      %p132 = scmp.ne.s32.totalorder %s124, %s126
      %p133 = scmp.eq.s32.totalorder %s20, 1
      %p134 = por %p132, %p133
      %p135 = scmp.ne.s32.totalorder %s126, %s127
      %p136 = scmp.eq.s32.totalorder %s20, 0
      %p137 = por %p135, %p136
      %p138 = scmp.ne.s32.totalorder %s126, %s127
      %p139 = scmp.eq.s32.totalorder %s21, 1
      %p140 = por %p138, %p139
      %p142 = scmp.ne.s32.totalorder %s127, %s141
      %p143 = scmp.eq.s32.totalorder %s21, 0
      %p144 = por %p142, %p143
      %s146 = sadd.s32 %s145, 1
      %p149 = scmp.eq.s32.totalorder %s15, 1
      %p150 = scmp.ne.s32.totalorder %s145, %s147
      %p151 = scmp.eq.s32.totalorder %s15, 0
      %p152 = por %p150, %p151
      %p153 = scmp.ne.s32.totalorder %s145, %s147
      %p154 = scmp.eq.s32.totalorder %s20, 1
      %p155 = por %p153, %p154
      %p156 = scmp.ne.s32.totalorder %s147, %s148
      %p157 = scmp.eq.s32.totalorder %s20, 0
      %p158 = por %p156, %p157
      %p159 = scmp.ne.s32.totalorder %s147, %s148
      %p160 = scmp.eq.s32.totalorder %s21, 1
      %p161 = por %p159, %p160
      %p163 = scmp.ne.s32.totalorder %s148, %s162
      %p164 = scmp.eq.s32.totalorder %s21, 0
      %p165 = por %p163, %p164
      %s167 = sadd.s32 %s166, 1
      %p170 = scmp.eq.s32.totalorder %s15, 1
      %p171 = scmp.ne.s32.totalorder %s166, %s168
      %p172 = scmp.eq.s32.totalorder %s15, 0
      %p173 = por %p171, %p172
      %p174 = scmp.ne.s32.totalorder %s166, %s168
      %p175 = scmp.eq.s32.totalorder %s20, 1
      %p176 = por %p174, %p175
      %p177 = scmp.ne.s32.totalorder %s168, %s169
      %p178 = scmp.eq.s32.totalorder %s20, 0
      %p179 = por %p177, %p178
      %p180 = scmp.ne.s32.totalorder %s168, %s169
      %p181 = scmp.eq.s32.totalorder %s21, 1
      %p182 = por %p180, %p181
      %p184 = scmp.ne.s32.totalorder %s169, %s183
      %p185 = scmp.eq.s32.totalorder %s21, 0
      %p186 = por %p184, %p185
      %s187 = ssub.s32 %s22, %s34
      %s188 = ssub.s32 %s23, %s30
      %s189 = sor.u32 %s187, %s188
      %p190 = scmp.eq.s32.totalorder %s189, 0
      %s192 = sadd.s32 %s191, 1
      %s193 = scalar_select %p190, %s191, %s192
      %p196 = pneg %p190
      %p197 = scmp.eq.s32.totalorder %s15, 1
      %p198 = por %p196, %p197
      %p199 = scmp.ne.s32.totalorder %s191, %s194
      %p200 = scmp.eq.s32.totalorder %s15, 0
      %p201 = por %p199, %p200
      %p202 = scmp.ne.s32.totalorder %s191, %s194
      %p203 = scmp.eq.s32.totalorder %s20, 1
      %p204 = por %p202, %p203
      %p205 = scmp.ne.s32.totalorder %s194, %s195
      %p206 = scmp.eq.s32.totalorder %s20, 0
      %p207 = por %p205, %p206
      %p208 = scmp.ne.s32.totalorder %s194, %s195
      %p209 = scmp.eq.s32.totalorder %s21, 1
      %p210 = por %p208, %p209
      %p212 = scmp.ne.s32.totalorder %s195, %s211
      %p213 = scmp.eq.s32.totalorder %s21, 0
      %p214 = por %p212, %p213
      %p215 = scmp.le.s32.totalorder 1, %s15
      %p216 = scmp.lt.s32.totalorder %s15, 3
      %p217 = pnand %p215, %p216
      %p218 = pneg %p217
      // Predicated region
      $region9: #{forward.1} parent=5 // pred_check
        _
      $region10: #{forward.1} parent=5 // pred_check_branch
        %220 = sbr.rel (%p217) target = $region12
      $region11: #{forward.1} parent=5 // pred_region
        %s221 = ssub.s32 %s15, 1
        // Predicated region
        $region13: #{forward.1} parent=11 // pred_check
          %p222 = pneg %p74
        $region14: #{forward.1} parent=11 // pred_check_branch
          %224 = sbr.rel (%p222) target = $region16
        $region15: #{forward.1} parent=11 // pred_region
          %s226 = ssub.s32 2048, 2048
          %227 = vsyncadd [#allocation3], %s226
          %s228 = sshll.u32 [#allocation2], 4
          %s229 = int_to_ptr.vmem [resolvable:$true] %s228
          %234 = dma.hbm_to_vmem [thread:$0]  %s1, 2048, %s229, [#allocation3], 128, 128, 8
        $region16: #{forward.1} parent=11 // pred_fallthru
          _
        // Predicated region
        $region17: #{forward.1} parent=11 // pred_check
          %p235 = pneg %p95
        $region18: #{forward.1} parent=11 // pred_check_branch
          %237 = sbr.rel (%p235) target = $region20
        $region19: #{forward.1} parent=11 // pred_region
          %s239 = ssub.s32 2048, 2048
          %240 = vsyncadd [#allocation5], %s239
          %s241 = sshll.u32 [#allocation4], 4
          %s242 = int_to_ptr.vmem [resolvable:$true] %s241
          %247 = dma.hbm_to_vmem [thread:$0]  %s2, 2048, %s242, [#allocation5], 128, 128, 8
        $region20: #{forward.1} parent=11 // pred_fallthru
          _
        // Predicated region
        $region21: #{forward.1} parent=11 // pred_check
          %p248 = pneg %p116
        $region22: #{forward.1} parent=11 // pred_check_branch
          %250 = sbr.rel (%p248) target = $region24
        $region23: #{forward.1} parent=11 // pred_region
          _
        $region24: #{forward.1} parent=11 // pred_fallthru
          _
        // Predicated region
        $region25: #{forward.1} parent=11 // pred_check
          %p251 = pneg %p137
        $region26: #{forward.1} parent=11 // pred_check_branch
          %253 = sbr.rel (%p251) target = $region28
        $region27: #{forward.1} parent=11 // pred_region
          _
        $region28: #{forward.1} parent=11 // pred_fallthru
          _
        // Predicated region
        $region29: #{forward.1} parent=11 // pred_check
          %p254 = pneg %p158
        $region30: #{forward.1} parent=11 // pred_check_branch
          %256 = sbr.rel (%p254) target = $region32
        $region31: #{forward.1} parent=11 // pred_region
          _
        $region32: #{forward.1} parent=11 // pred_fallthru
          _
        // Predicated region
        $region33: #{forward.1} parent=11 // pred_check
          %p257 = pneg %p179
        $region34: #{forward.1} parent=11 // pred_check_branch
          %259 = sbr.rel (%p257) target = $region36
        $region35: #{forward.1} parent=11 // pred_region
          _
        $region36: #{forward.1} parent=11 // pred_fallthru
          _
      $region12: #{forward.1} parent=5 // pred_fallthru
        _
      %p260 = scmp.lt.s32.totalorder %s15, 2
      // Predicated region
      $region37: #{forward.1} parent=5 // pred_check
        %p261 = pneg %p260
      $region38: #{forward.1} parent=5 // pred_check_branch
        %263 = sbr.rel (%p261) target = $region40
      $region39: #{forward.1} parent=5 // pred_region
        // Predicated region
        $region41: #{forward.1} parent=39 // pred_check
          %p264 = pneg %p47
        $region42: #{forward.1} parent=39 // pred_check_branch
          %266 = sbr.rel (%p264) target = $region44
        $region43: #{forward.1} parent=39 // pred_region
          %p267 = scmp.lt.s32.totalorder %s22, 1
          %s268 = scalar_select %p267, %s22, 1
          %s269 = scalar_lea.vmem %s0, %s268
        $region44: #{forward.1} parent=39 // pred_fallthru
          _
      $region40: #{forward.1} parent=5 // pred_fallthru
        _
      %p270 = scmp.le.s32.totalorder 1, %s15
      %p271 = scmp.lt.s32.totalorder %s15, 3
      %p272 = pnand %p270, %p271
      %p273 = pneg %p272
      // Predicated region
      $region45: #{forward.1} parent=5 // pred_check
        _
      $region46: #{forward.1} parent=5 // pred_check_branch
        %275 = sbr.rel (%p272) target = $region48
      $region47: #{forward.1} parent=5 // pred_region
        %s276 = ssub.s32 %s15, 1
        // Predicated region
        $region49: #{forward.1} parent=47 // pred_check
          %p277 = pneg %p74
        $region50: #{forward.1} parent=47 // pred_check_branch
          %279 = sbr.rel (%p277) target = $region52
        $region51: #{forward.1} parent=47 // pred_region
          %280 = dma.done [#allocation3], 2048
        $region52: #{forward.1} parent=47 // pred_fallthru
          _
        // Predicated region
        $region53: #{forward.1} parent=47 // pred_check
          %p281 = pneg %p95
        $region54: #{forward.1} parent=47 // pred_check_branch
          %283 = sbr.rel (%p281) target = $region56
        $region55: #{forward.1} parent=47 // pred_region
          %284 = dma.done [#allocation5], 2048
        $region56: #{forward.1} parent=47 // pred_fallthru
          _
        %p285 = scmp.lt.s32.totalorder %s24, 1
        %s286 = scalar_select %p285, %s24, 1
        %s287 = scalar_lea.vmem %s0, %s286
        %p288 = pneg %p53
        %p289 = pneg %p50
        %p290 = pneg %p74
        %p291 = pneg %p71
        %p292 = pneg %p95
        %p293 = pneg %p92
        %p294 = pneg %p116
        %p295 = pneg %p113
        %p296 = pneg %p137
        %p297 = pneg %p134
        %p298 = pneg %p158
        %p299 = pneg %p155
        %p300 = pneg %p179
        %p301 = pneg %p176
        %p302 = pneg %p207
        %p303 = pneg %p204
        %p304 = scmp.lt.s32.totalorder %s24, 1
        %s305 = scalar_select %p304, %s24, 1
        %p306 = scmp.lt.s32.totalorder %s25, 0
        %s307 = scalar_select %p306, %s25, 0
        %s308 = smul.addr %s305, 2
        %s309 = sadd.s32 %s307, %s308
        %s310 = smul.addr %s309, 8
        %s311 = scalar_lea.vmem %s7, %s310
        %p312 = scmp.lt.s32.totalorder %s24, 1
        %s313 = scalar_select %p312, %s24, 1
        %s314 = scalar_lea.vmem %s0, %s313
        %p315 = scmp.lt.s32.totalorder %s24, 1
        %s316 = scalar_select %p315, %s24, 1
        %p317 = scmp.lt.s32.totalorder %s25, 0
        %s318 = scalar_select %p317, %s25, 0
        %s319 = smul.addr %s316, 2
        %s320 = sadd.s32 %s318, %s319
        %s321 = smul.addr %s320, 8
        %s322 = scalar_lea.vmem %s7, %s321
        %v323 = vld [vmem:[%s314] sm:$0x1]
        %v324 = vld [vmem:[#allocation2] sm:$0xff]
        %v325 = vld [vmem:[#allocation2 + $0x8] sm:$0xff]
        %v326 = vld [vmem:[#allocation2 + $0x10] sm:$0xff]
        %v327 = vld [vmem:[#allocation2 + $0x18] sm:$0xff]
        %v328 = vld [vmem:[#allocation2 + $0x20] sm:$0xff]
        %v329 = vld [vmem:[#allocation2 + $0x28] sm:$0xff]
        %v330 = vld [vmem:[#allocation2 + $0x30] sm:$0xff]
        %v331 = vld [vmem:[#allocation2 + $0x38] sm:$0xff]
        %v332 = vld [vmem:[#allocation2 + $0x40] sm:$0xff]
        %v333 = vld [vmem:[#allocation2 + $0x48] sm:$0xff]
        %v334 = vld [vmem:[#allocation2 + $0x50] sm:$0xff]
        %v335 = vld [vmem:[#allocation2 + $0x58] sm:$0xff]
        %v336 = vld [vmem:[#allocation2 + $0x60] sm:$0xff]
        %v337 = vld [vmem:[#allocation2 + $0x68] sm:$0xff]
        %v338 = vld [vmem:[#allocation2 + $0x70] sm:$0xff]
        %v339 = vld [vmem:[#allocation2 + $0x78] sm:$0xff]
        %v341 = vlaneseq
        %v342 = vshrl.u32 %v341, 7
        %v343 = vsub.s32 0, %v342
        %v344 = vrot.slane %v323, %v343
        %v346 = vmul.f32 %v324, %v344
        %v347 = vmul.f32 %v325, %v344
        %v348 = vmul.f32 %v326, %v344
        %v349 = vmul.f32 %v327, %v344
        %v350 = vmul.f32 %v328, %v344
        %v351 = vmul.f32 %v329, %v344
        %v352 = vmul.f32 %v330, %v344
        %v353 = vmul.f32 %v331, %v344
        %v354 = vmul.f32 %v332, %v344
        %v355 = vmul.f32 %v333, %v344
        %v356 = vmul.f32 %v334, %v344
        %v357 = vmul.f32 %v335, %v344
        %v358 = vmul.f32 %v336, %v344
        %v359 = vmul.f32 %v337, %v344
        %v360 = vmul.f32 %v338, %v344
        %v361 = vmul.f32 %v339, %v344
        %vm362 = vcmask 31744
        %v363 = vsel %vm362, %v346, 0.0
        %364 = vadd.xlane.f32.xlu0 %v363
        %v365 = vpop.xlane.xlu0 %364
        %v366 = vsel %vm362, %v347, 0.0
        %367 = vadd.xlane.f32.xlu0 %v366
        %v368 = vpop.xlane.xlu0 %367
        %v369 = vsel %vm362, %v348, 0.0
        %370 = vadd.xlane.f32.xlu0 %v369
        %v371 = vpop.xlane.xlu0 %370
        %v372 = vsel %vm362, %v349, 0.0
        %373 = vadd.xlane.f32.xlu0 %v372
        %v374 = vpop.xlane.xlu0 %373
        %v375 = vsel %vm362, %v350, 0.0
        %376 = vadd.xlane.f32.xlu0 %v375
        %v377 = vpop.xlane.xlu0 %376
        %v378 = vsel %vm362, %v351, 0.0
        %379 = vadd.xlane.f32.xlu0 %v378
        %v380 = vpop.xlane.xlu0 %379
        %v381 = vsel %vm362, %v352, 0.0
        %382 = vadd.xlane.f32.xlu0 %v381
        %v383 = vpop.xlane.xlu0 %382
        %v384 = vsel %vm362, %v353, 0.0
        %385 = vadd.xlane.f32.xlu0 %v384
        %v386 = vpop.xlane.xlu0 %385
        %v387 = vsel %vm362, %v354, 0.0
        %388 = vadd.xlane.f32.xlu0 %v387
        %v389 = vpop.xlane.xlu0 %388
        %v390 = vsel %vm362, %v355, 0.0
        %391 = vadd.xlane.f32.xlu0 %v390
        %v392 = vpop.xlane.xlu0 %391
        %v393 = vsel %vm362, %v356, 0.0
        %394 = vadd.xlane.f32.xlu0 %v393
        %v395 = vpop.xlane.xlu0 %394
        %v396 = vsel %vm362, %v357, 0.0
        %397 = vadd.xlane.f32.xlu0 %v396
        %v398 = vpop.xlane.xlu0 %397
        %v399 = vsel %vm362, %v358, 0.0
        %400 = vadd.xlane.f32.xlu0 %v399
        %v401 = vpop.xlane.xlu0 %400
        %v402 = vsel %vm362, %v359, 0.0
        %403 = vadd.xlane.f32.xlu0 %v402
        %v404 = vpop.xlane.xlu0 %403
        %v405 = vsel %vm362, %v360, 0.0
        %406 = vadd.xlane.f32.xlu0 %v405
        %v407 = vpop.xlane.xlu0 %406
        %v408 = vsel %vm362, %v361, 0.0
        %409 = vadd.xlane.f32.xlu0 %v408
        %v410 = vpop.xlane.xlu0 %409
        %v411 = vld [vmem:[#allocation4] sm:$0xff]
        %v412 = vld [vmem:[#allocation4 + $0x8] sm:$0xff]
        %v413 = vld [vmem:[#allocation4 + $0x10] sm:$0xff]
        %v414 = vld [vmem:[#allocation4 + $0x18] sm:$0xff]
        %v415 = vld [vmem:[#allocation4 + $0x20] sm:$0xff]
        %v416 = vld [vmem:[#allocation4 + $0x28] sm:$0xff]
        %v417 = vld [vmem:[#allocation4 + $0x30] sm:$0xff]
        %v418 = vld [vmem:[#allocation4 + $0x38] sm:$0xff]
        %v419 = vld [vmem:[#allocation4 + $0x40] sm:$0xff]
        %v420 = vld [vmem:[#allocation4 + $0x48] sm:$0xff]
        %v421 = vld [vmem:[#allocation4 + $0x50] sm:$0xff]
        %v422 = vld [vmem:[#allocation4 + $0x58] sm:$0xff]
        %v423 = vld [vmem:[#allocation4 + $0x60] sm:$0xff]
        %v424 = vld [vmem:[#allocation4 + $0x68] sm:$0xff]
        %v425 = vld [vmem:[#allocation4 + $0x70] sm:$0xff]
        %v426 = vld [vmem:[#allocation4 + $0x78] sm:$0xff]
        %v427 = vld [vmem:[%s3] sm:$0xff]
        %v428 = vld [vmem:[%s3 + $0x8] sm:$0xff]
        %v429 = vld [vmem:[%s3 + $0x10] sm:$0xff]
        %v430 = vld [vmem:[%s3 + $0x18] sm:$0xff]
        %v431 = vld [vmem:[%s3 + $0x20] sm:$0xff]
        %v432 = vld [vmem:[%s3 + $0x28] sm:$0xff]
        %v433 = vld [vmem:[%s3 + $0x30] sm:$0xff]
        %v434 = vld [vmem:[%s3 + $0x38] sm:$0xff]
        %v435 = vld [vmem:[%s3 + $0x40] sm:$0xff]
        %v436 = vld [vmem:[%s3 + $0x48] sm:$0xff]
        %v437 = vld [vmem:[%s3 + $0x50] sm:$0xff]
        %v438 = vld [vmem:[%s3 + $0x58] sm:$0xff]
        %v439 = vld [vmem:[%s3 + $0x60] sm:$0xff]
        %v440 = vld [vmem:[%s3 + $0x68] sm:$0xff]
        %v441 = vld [vmem:[%s3 + $0x70] sm:$0xff]
        %v442 = vld [vmem:[%s3 + $0x78] sm:$0xff]
        %s443 = scalar_lea.vmem %s3, 128
        %v444 = vld [vmem:[%s443] sm:$0xff]
        %v445 = vld [vmem:[%s443 + $0x8] sm:$0xff]
        %v446 = vld [vmem:[%s443 + $0x10] sm:$0xff]
        %v447 = vld [vmem:[%s443 + $0x18] sm:$0xff]
        %v448 = vld [vmem:[%s443 + $0x20] sm:$0xff]
        %v449 = vld [vmem:[%s443 + $0x28] sm:$0xff]
        %v450 = vld [vmem:[%s443 + $0x30] sm:$0xff]
        %v451 = vld [vmem:[%s443 + $0x38] sm:$0xff]
        %v452 = vld [vmem:[%s443 + $0x40] sm:$0xff]
        %v453 = vld [vmem:[%s443 + $0x48] sm:$0xff]
        %v454 = vld [vmem:[%s443 + $0x50] sm:$0xff]
        %v455 = vld [vmem:[%s443 + $0x58] sm:$0xff]
        %v456 = vld [vmem:[%s443 + $0x60] sm:$0xff]
        %v457 = vld [vmem:[%s443 + $0x68] sm:$0xff]
        %v458 = vld [vmem:[%s443 + $0x70] sm:$0xff]
        %v459 = vld [vmem:[%s443 + $0x78] sm:$0xff]
        %s460 = scalar_lea.vmem %s3, 256
        %v461 = vld [vmem:[%s460] sm:$0xff]
        %v462 = vld [vmem:[%s460 + $0x8] sm:$0xff]
        %v463 = vld [vmem:[%s460 + $0x10] sm:$0xff]
        %v464 = vld [vmem:[%s460 + $0x18] sm:$0xff]
        %v465 = vld [vmem:[%s460 + $0x20] sm:$0xff]
        %v466 = vld [vmem:[%s460 + $0x28] sm:$0xff]
        %v467 = vld [vmem:[%s460 + $0x30] sm:$0xff]
        %v468 = vld [vmem:[%s460 + $0x38] sm:$0xff]
        %v469 = vld [vmem:[%s460 + $0x40] sm:$0xff]
        %v470 = vld [vmem:[%s460 + $0x48] sm:$0xff]
        %v471 = vld [vmem:[%s460 + $0x50] sm:$0xff]
        %v472 = vld [vmem:[%s460 + $0x58] sm:$0xff]
        %v473 = vld [vmem:[%s460 + $0x60] sm:$0xff]
        %v474 = vld [vmem:[%s460 + $0x68] sm:$0xff]
        %v475 = vld [vmem:[%s460 + $0x70] sm:$0xff]
        %v476 = vld [vmem:[%s460 + $0x78] sm:$0xff]
        %v477 = vld [vmem:[%s4] sm:$0xff]
        %v478 = vld [vmem:[%s4 + $0x8] sm:$0xf]
        %v479 = vld [vmem:[%s5] sm:$0xff]
        %v480 = vld [vmem:[%s5 + $0x8] sm:$0xff]
        %v481 = vld [vmem:[%s5 + $0x10] sm:$0xff]
        %v482 = vld [vmem:[%s5 + $0x18] sm:$0xff]
        %v483 = vld [vmem:[%s5 + $0x20] sm:$0xff]
        %v484 = vld [vmem:[%s5 + $0x28] sm:$0xff]
        %v485 = vld [vmem:[%s5 + $0x30] sm:$0xff]
        %v486 = vld [vmem:[%s5 + $0x38] sm:$0xff]
        %v487 = vld [vmem:[%s5 + $0x40] sm:$0xff]
        %v488 = vld [vmem:[%s5 + $0x48] sm:$0xff]
        %v489 = vld [vmem:[%s5 + $0x50] sm:$0xff]
        %v490 = vld [vmem:[%s5 + $0x58] sm:$0xff]
        %v491 = vld [vmem:[%s5 + $0x60] sm:$0xff]
        %v492 = vld [vmem:[%s5 + $0x68] sm:$0xff]
        %v493 = vld [vmem:[%s5 + $0x70] sm:$0xff]
        %v494 = vld [vmem:[%s5 + $0x78] sm:$0xff]
        %s495 = scalar_lea.vmem %s5, 128
        %v496 = vld [vmem:[%s495] sm:$0xff]
        %v497 = vld [vmem:[%s495 + $0x8] sm:$0xff]
        %v498 = vld [vmem:[%s495 + $0x10] sm:$0xff]
        %v499 = vld [vmem:[%s495 + $0x18] sm:$0xff]
        %v500 = vld [vmem:[%s495 + $0x20] sm:$0xff]
        %v501 = vld [vmem:[%s495 + $0x28] sm:$0xff]
        %v502 = vld [vmem:[%s495 + $0x30] sm:$0xff]
        %v503 = vld [vmem:[%s495 + $0x38] sm:$0xff]
        %v504 = vld [vmem:[%s495 + $0x40] sm:$0xff]
        %v505 = vld [vmem:[%s495 + $0x48] sm:$0xff]
        %v506 = vld [vmem:[%s495 + $0x50] sm:$0xff]
        %v507 = vld [vmem:[%s495 + $0x58] sm:$0xff]
        %v508 = vld [vmem:[%s495 + $0x60] sm:$0xff]
        %v509 = vld [vmem:[%s495 + $0x68] sm:$0xff]
        %v510 = vld [vmem:[%s495 + $0x70] sm:$0xff]
        %v511 = vld [vmem:[%s495 + $0x78] sm:$0xff]
        %s512 = scalar_lea.vmem %s5, 256
        %v513 = vld [vmem:[%s512] sm:$0xff]
        %v514 = vld [vmem:[%s512 + $0x8] sm:$0xff]
        %v515 = vld [vmem:[%s512 + $0x10] sm:$0xff]
        %v516 = vld [vmem:[%s512 + $0x18] sm:$0xff]
        %v517 = vld [vmem:[%s512 + $0x20] sm:$0xff]
        %v518 = vld [vmem:[%s512 + $0x28] sm:$0xff]
        %v519 = vld [vmem:[%s512 + $0x30] sm:$0xff]
        %v520 = vld [vmem:[%s512 + $0x38] sm:$0xff]
        %v521 = vld [vmem:[%s512 + $0x40] sm:$0xff]
        %v522 = vld [vmem:[%s512 + $0x48] sm:$0xff]
        %v523 = vld [vmem:[%s512 + $0x50] sm:$0xff]
        %v524 = vld [vmem:[%s512 + $0x58] sm:$0xff]
        %v525 = vld [vmem:[%s512 + $0x60] sm:$0xff]
        %v526 = vld [vmem:[%s512 + $0x68] sm:$0xff]
        %v527 = vld [vmem:[%s512 + $0x70] sm:$0xff]
        %v528 = vld [vmem:[%s512 + $0x78] sm:$0xff]
        %v529 = vld [vmem:[%s6] sm:$0xff]
        %v530 = vld [vmem:[%s6 + $0x8] sm:$0xf]
        %v531 = vlaneseq
        %v532 = vshrl.u32 %v531, 7
        %v533 = vadd.s32 %v532, 8
        %v534 = vcvt.s32.f32 %v532
        %v535 = vcvt.s32.f32 %v533
        %v536 = vlaneseq
        %v537 = vand.u32 %v536, 127
        %v538 = vcvt.s32.f32 %v537
        %v539 = vrcp.pop 3.0
        %v540 = vmul.f32 %v534, %v539
        %v541 = vmul.f32 %v535, %v539
        %v542 = vfloor.f32 %v540
        %v543 = vfloor.f32 %v541
        %v544 = vmul.f32 %v542, 3.0
        %v545 = vmul.f32 %v543, 3.0
        %v546 = vsub.f32 %v534, %v544
        %v547 = vsub.f32 %v535, %v545
        %s548 = smul.u32 %s25, 256
        %s549 = scvt.s32.f32 %s548
        %v550 = vmul.f32 %v538, 4.0
        %v551 = vstv %s549
        %v552 = vadd.f32 %v551, %v550
        %v553 = vadd.f32 %v552, %v542
        %v554 = vadd.f32 %v552, %v543
        %v555 = vrcp.pop 16.0
        %v556 = vmul.f32 %v553, %v555
        %v557 = vmul.f32 %v554, %v555
        %v558 = vfloor.f32 %v556
        %v559 = vfloor.f32 %v557
        %v560 = vmul.f32 %v558, 16.0
        %v561 = vmul.f32 %v559, 16.0
        %v562 = vsub.f32 %v553, %v560
        %v563 = vsub.f32 %v554, %v561
        %v564 = vsub.f32 %v562, 7.5
        %v565 = vsub.f32 %v563, 7.5
        %v566 = vrcp.pop 15.0
        %v567 = vmul.f32 %v564, %v566
        %v568 = vmul.f32 %v565, %v566
        %v569 = vrcp.pop 0.5
        %v570 = vmul.f32 %v567, %v569
        %v571 = vmul.f32 %v568, %v569
        %v572 = vsub.f32 %v558, 7.5
        %v573 = vsub.f32 %v559, 7.5
        %v574 = vmul.f32 %v572, %v566
        %v575 = vmul.f32 %v573, %v566
        %v576 = vmul.f32 %v574, %v569
        %v577 = vmul.f32 %v575, %v569
        %v578 = vmul.f32 %v570, %v570
        %v579 = vmul.f32 %v571, %v571
        %v580 = vmul.f32 %v576, %v576
        %v581 = vmul.f32 %v577, %v577
        %v582 = vadd.f32 %v578, %v580
        %v583 = vadd.f32 %v579, %v581
        %v584 = vrsqrt.pop %v582
        %v585 = vmul.f32 %v582, %v584
        %vm586 = vcmp.eq.f32.partialorder %v582, inf
        %v587 = vsel %vm586, %v582, %v585
        %vm588 = vcmp.eq.f32.partialorder %v582, 0.0
        %v589 = vand.u32 %v582, 2147483648
        %v590 = vsel %vm588, %v589, %v587
        %v591 = vrsqrt.pop %v583
        %v592 = vmul.f32 %v583, %v591
        %vm593 = vcmp.eq.f32.partialorder %v583, inf
        %v594 = vsel %vm593, %v583, %v592
        %vm595 = vcmp.eq.f32.partialorder %v583, 0.0
        %v596 = vand.u32 %v583, 2147483648
        %v597 = vsel %vm595, %v596, %v594
        %vm598 = vcmp.lt.f32.partialorder %v546, 0.5
        %vm599 = vcmp.lt.f32.partialorder %v547, 0.5
        %vm600 = vcmp.lt.f32.partialorder %v546, 1.5
        %vm601 = vcmp.lt.f32.partialorder %v547, 1.5
        %v602 = vsel %vm600, %v576, %v590
        %v603 = vsel %vm601, %v577, %v597
        %v604 = vsel %vm598, %v570, %v602
        %v605 = vsel %vm599, %v571, %v603
        %vm606 = vcmask 97280
        %v608 = vsel %vm606, %v411, 0
        %v611 = vsel %vm606, %v412, 0
        %v614 = vsel %vm606, %v413, 0
        %v617 = vsel %vm606, %v414, 0
        %v620 = vsel %vm606, %v415, 0
        %v623 = vsel %vm606, %v416, 0
        %v626 = vsel %vm606, %v417, 0
        %v629 = vsel %vm606, %v418, 0
        %v632 = vsel %vm606, %v419, 0
        %v635 = vsel %vm606, %v420, 0
        %v638 = vsel %vm606, %v421, 0
        %v641 = vsel %vm606, %v422, 0
        %v644 = vsel %vm606, %v423, 0
        %v647 = vsel %vm606, %v424, 0
        %v650 = vsel %vm606, %v425, 0
        %v653 = vsel %vm606, %v426, 0
        %vm655 = vcmask 1043456
        %v657 = vsel %vm655, %v605, 0
        %659 = vmatprep.subr.mxu0 0.0
        %660 = vmatpush1.msra.mxu0 %v604
        %661 = vmatprep.subr.mxu0 0.0
        %662 = vmatpush1.msra.mxu0 %v657
        %663 = vmatprep.subr.mxu0 0.0
        %664 = vmatpush1.msra.mxu0 0.0
        %665 = vmatprep.subr.mxu0 0.0
        %666 = vmatpush1.msra.mxu0 0.0
        %667 = vmatprep.subr.mxu0 0.0
        %668 = vmatpush1.msra.mxu0 0.0
        %669 = vmatprep.subr.mxu0 0.0
        %670 = vmatpush1.msra.mxu0 0.0
        %671 = vmatprep.subr.mxu0 0.0
        %672 = vmatpush1.msra.mxu0 0.0
        %673 = vmatprep.subr.mxu0 0.0
        %674 = vmatpush1.msra.mxu0 0.0
        %675 = vmatprep.subr.mxu0 0.0
        %676 = vmatpush1.msra.mxu0 0.0
        %677 = vmatprep.subr.mxu0 0.0
        %678 = vmatpush1.msra.mxu0 0.0
        %679 = vmatprep.subr.mxu0 0.0
        %680 = vmatpush1.msra.mxu0 0.0
        %681 = vmatprep.subr.mxu0 0.0
        %682 = vmatpush1.msra.mxu0 0.0
        %683 = vmatprep.subr.mxu0 0.0
        %684 = vmatpush1.msra.mxu0 0.0
        %685 = vmatprep.subr.mxu0 0.0
        %686 = vmatpush1.msra.mxu0 0.0
        %687 = vmatprep.subr.mxu0 0.0
        %688 = vmatpush1.msra.mxu0 0.0
        %689 = vmatprep.subr.mxu0 0.0
        %690 = vmatpush1.msra.mxu0 0.0
        %691 = vmatprep.subr.mxu0 0.0
        %692 = vmatpush1.msra.mxu0 0.0
        %693 = vmatprep.subr.mxu0 0.0
        %694 = vmatpush1.msra.mxu0 0.0
        %695 = vmatprep.subr.mxu0 0.0
        %696 = vmatpush1.msra.mxu0 0.0
        %697 = vmatprep.subr.mxu0 0.0
        %698 = vmatpush1.msra.mxu0 0.0
        %699 = vmatprep.subr.mxu0 0.0
        %700 = vmatpush1.msra.mxu0 0.0
        %701 = vmatprep.subr.mxu0 0.0
        %702 = vmatpush1.msra.mxu0 0.0
        %703 = vmatprep.subr.mxu0 0.0
        %704 = vmatpush1.msra.mxu0 0.0
        %705 = vmatprep.subr.mxu0 0.0
        %706 = vmatpush1.msra.mxu0 0.0
        %707 = vmatprep.subr.mxu0 0.0
        %708 = vmatpush1.msra.mxu0 0.0
        %709 = vmatprep.subr.mxu0 0.0
        %710 = vmatpush1.msra.mxu0 0.0
        %711 = vmatprep.subr.mxu0 0.0
        %712 = vmatpush1.msra.mxu0 0.0
        %713 = vmatprep.subr.mxu0 0.0
        %714 = vmatpush1.msra.mxu0 0.0
        %715 = vmatprep.subr.mxu0 0.0
        %716 = vmatpush1.msra.mxu0 0.0
        %717 = vmatprep.subr.mxu0 0.0
        %718 = vmatpush1.msra.mxu0 0.0
        %719 = vmatprep.subr.mxu0 0.0
        %720 = vmatpush1.msra.mxu0 0.0
        %721 = vmatprep.subr.mxu0 0.0
        %722 = vmatpush1.msra.mxu0 0.0
        %723 = vmatprep.mubr.f32.mxu0 0.0
        %724 = vmatmul.mubr.f32.gmra.mrb[0].mxu0 %v608
        %v725 = vpop.f32.mrb[0].mxu0
        %v726 = vadd.f32 %v365, %v725
        %v727 = vpop.f32.mrb[0].mxu0
        %728 = vmatprep.mubr.f32.mxu0 0.0
        %729 = vmatmul.mubr.f32.gmra.mrb[0].mxu0 %v611
        %v730 = vpop.f32.mrb[0].mxu0
        %v731 = vadd.f32 %v368, %v730
        %v732 = vpop.f32.mrb[0].mxu0
        %733 = vmatprep.mubr.f32.mxu0 0.0
        %734 = vmatmul.mubr.f32.gmra.mrb[0].mxu0 %v614
        %v735 = vpop.f32.mrb[0].mxu0
        %v736 = vadd.f32 %v371, %v735
        %v737 = vpop.f32.mrb[0].mxu0
        %738 = vmatprep.mubr.f32.mxu0 0.0
        %739 = vmatmul.mubr.f32.gmra.mrb[0].mxu0 %v617
        %v740 = vpop.f32.mrb[0].mxu0
        %v741 = vadd.f32 %v374, %v740
        %v742 = vpop.f32.mrb[0].mxu0
        %743 = vmatprep.mubr.f32.mxu0 0.0
        %744 = vmatmul.mubr.f32.gmra.mrb[0].mxu0 %v620
        %v745 = vpop.f32.mrb[0].mxu0
        %v746 = vadd.f32 %v377, %v745
        %v747 = vpop.f32.mrb[0].mxu0
        %748 = vmatprep.mubr.f32.mxu0 0.0
        %749 = vmatmul.mubr.f32.gmra.mrb[0].mxu0 %v623
        %v750 = vpop.f32.mrb[0].mxu0
        %v751 = vadd.f32 %v380, %v750
        %v752 = vpop.f32.mrb[0].mxu0
        %753 = vmatprep.mubr.f32.mxu0 0.0
        %754 = vmatmul.mubr.f32.gmra.mrb[0].mxu0 %v626
        %v755 = vpop.f32.mrb[0].mxu0
        %v756 = vadd.f32 %v383, %v755
        %v757 = vpop.f32.mrb[0].mxu0
        %758 = vmatprep.mubr.f32.mxu0 0.0
        %759 = vmatmul.mubr.f32.gmra.mrb[0].mxu0 %v629
        %v760 = vpop.f32.mrb[0].mxu0
        %v761 = vadd.f32 %v386, %v760
        %v762 = vpop.f32.mrb[0].mxu0
        %763 = vmatprep.mubr.f32.mxu0 0.0
        %764 = vmatmul.mubr.f32.gmra.mrb[0].mxu0 %v632
        %v765 = vpop.f32.mrb[0].mxu0
        %v766 = vadd.f32 %v389, %v765
        %v767 = vpop.f32.mrb[0].mxu0
        %768 = vmatprep.mubr.f32.mxu0 0.0
        %769 = vmatmul.mubr.f32.gmra.mrb[0].mxu0 %v635
        %v770 = vpop.f32.mrb[0].mxu0
        %v771 = vadd.f32 %v392, %v770
        %v772 = vpop.f32.mrb[0].mxu0
        %773 = vmatprep.mubr.f32.mxu0 0.0
        %774 = vmatmul.mubr.f32.gmra.mrb[0].mxu0 %v638
        %v775 = vpop.f32.mrb[0].mxu0
        %v776 = vadd.f32 %v395, %v775
        %v777 = vpop.f32.mrb[0].mxu0
        %778 = vmatprep.mubr.f32.mxu0 0.0
        %779 = vmatmul.mubr.f32.gmra.mrb[0].mxu0 %v641
        %v780 = vpop.f32.mrb[0].mxu0
        %v781 = vadd.f32 %v398, %v780
        %v782 = vpop.f32.mrb[0].mxu0
        %783 = vmatprep.mubr.f32.mxu0 0.0
        %784 = vmatmul.mubr.f32.gmra.mrb[0].mxu0 %v644
        %v785 = vpop.f32.mrb[0].mxu0
        %v786 = vadd.f32 %v401, %v785
        %v787 = vpop.f32.mrb[0].mxu0
        %788 = vmatprep.mubr.f32.mxu0 0.0
        %789 = vmatmul.mubr.f32.gmra.mrb[0].mxu0 %v647
        %v790 = vpop.f32.mrb[0].mxu0
        %v791 = vadd.f32 %v404, %v790
        %v792 = vpop.f32.mrb[0].mxu0
        %793 = vmatprep.mubr.f32.mxu0 0.0
        %794 = vmatmul.mubr.f32.gmra.mrb[0].mxu0 %v650
        %v795 = vpop.f32.mrb[0].mxu0
        %v796 = vadd.f32 %v407, %v795
        %v797 = vpop.f32.mrb[0].mxu0
        %798 = vmatprep.mubr.f32.mxu0 0.0
        %799 = vmatmul.mubr.f32.gmra.mrb[0].mxu0 %v653
        %v800 = vpop.f32.mrb[0].mxu0
        %v801 = vadd.f32 %v410, %v800
        %v802 = vpop.f32.mrb[0].mxu0
        %803 = vdwg.mxu0
        %v804 = vtanh.pop %v726
        %v805 = vtanh.pop %v731
        %v806 = vtanh.pop %v736
        %v807 = vtanh.pop %v741
        %v808 = vtanh.pop %v746
        %v809 = vtanh.pop %v751
        %v810 = vtanh.pop %v756
        %v811 = vtanh.pop %v761
        %v812 = vtanh.pop %v766
        %v813 = vtanh.pop %v771
        %v814 = vtanh.pop %v776
        %v815 = vtanh.pop %v781
        %v816 = vtanh.pop %v786
        %v817 = vtanh.pop %v791
        %v818 = vtanh.pop %v796
        %v819 = vtanh.pop %v801
        %821 = vset.pattern.permute.xlu0 0
        %822 = vperm.xlu0 %821, %v479
        %v823 = vpop.permute.xlu0 %822
        %826 = vset.pattern.permute.xlu0 0
        %827 = vperm.xlu0 %826, %v480
        %v828 = vpop.permute.xlu0 %827
        %831 = vset.pattern.permute.xlu0 0
        %832 = vperm.xlu0 %831, %v481
        %v833 = vpop.permute.xlu0 %832
        %836 = vset.pattern.permute.xlu0 0
        %837 = vperm.xlu0 %836, %v482
        %v838 = vpop.permute.xlu0 %837
        %841 = vset.pattern.permute.xlu0 0
        %842 = vperm.xlu0 %841, %v483
        %v843 = vpop.permute.xlu0 %842
        %846 = vset.pattern.permute.xlu0 0
        %847 = vperm.xlu0 %846, %v484
        %v848 = vpop.permute.xlu0 %847
        %851 = vset.pattern.permute.xlu0 0
        %852 = vperm.xlu0 %851, %v485
        %v853 = vpop.permute.xlu0 %852
        %856 = vset.pattern.permute.xlu0 0
        %857 = vperm.xlu0 %856, %v486
        %v858 = vpop.permute.xlu0 %857
        %861 = vset.pattern.permute.xlu0 0
        %862 = vperm.xlu0 %861, %v487
        %v863 = vpop.permute.xlu0 %862
        %866 = vset.pattern.permute.xlu0 0
        %867 = vperm.xlu0 %866, %v488
        %v868 = vpop.permute.xlu0 %867
        %871 = vset.pattern.permute.xlu0 0
        %872 = vperm.xlu0 %871, %v489
        %v873 = vpop.permute.xlu0 %872
        %876 = vset.pattern.permute.xlu0 0
        %877 = vperm.xlu0 %876, %v490
        %v878 = vpop.permute.xlu0 %877
        %881 = vset.pattern.permute.xlu0 0
        %882 = vperm.xlu0 %881, %v491
        %v883 = vpop.permute.xlu0 %882
        %886 = vset.pattern.permute.xlu0 0
        %887 = vperm.xlu0 %886, %v492
        %v888 = vpop.permute.xlu0 %887
        %891 = vset.pattern.permute.xlu0 0
        %892 = vperm.xlu0 %891, %v493
        %v893 = vpop.permute.xlu0 %892
        %896 = vset.pattern.permute.xlu0 0
        %897 = vperm.xlu0 %896, %v494
        %v898 = vpop.permute.xlu0 %897
        %900 = vmatprep.subr.mxu0 0.0
        %901 = vmatpush1.msra.mxu0 %v804
        %902 = vmatprep.subr.mxu0 0.0
        %903 = vmatpush1.msra.mxu0 %v805
        %904 = vmatprep.subr.mxu0 0.0
        %905 = vmatpush1.msra.mxu0 %v806
        %906 = vmatprep.subr.mxu0 0.0
        %907 = vmatpush1.msra.mxu0 %v807
        %908 = vmatprep.subr.mxu0 0.0
        %909 = vmatpush1.msra.mxu0 %v808
        %910 = vmatprep.subr.mxu0 0.0
        %911 = vmatpush1.msra.mxu0 %v809
        %912 = vmatprep.subr.mxu0 0.0
        %913 = vmatpush1.msra.mxu0 %v810
        %914 = vmatprep.subr.mxu0 0.0
        %915 = vmatpush1.msra.mxu0 %v811
        %916 = vmatprep.subr.mxu0 0.0
        %917 = vmatpush1.msra.mxu0 %v812
        %918 = vmatprep.subr.mxu0 0.0
        %919 = vmatpush1.msra.mxu0 %v813
        %920 = vmatprep.subr.mxu0 0.0
        %921 = vmatpush1.msra.mxu0 %v814
        %922 = vmatprep.subr.mxu0 0.0
        %923 = vmatpush1.msra.mxu0 %v815
        %924 = vmatprep.subr.mxu0 0.0
        %925 = vmatpush1.msra.mxu0 %v816
        %926 = vmatprep.subr.mxu0 0.0
        %927 = vmatpush1.msra.mxu0 %v817
        %928 = vmatprep.subr.mxu0 0.0
        %929 = vmatpush1.msra.mxu0 %v818
        %930 = vmatprep.subr.mxu0 0.0
        %931 = vmatpush1.msra.mxu0 %v819
        %932 = vmatprep.subr.mxu0 0.0
        %933 = vmatpush1.msra.mxu0 0.0
        %934 = vmatprep.subr.mxu0 0.0
        %935 = vmatpush1.msra.mxu0 0.0
        %936 = vmatprep.subr.mxu0 0.0
        %937 = vmatpush1.msra.mxu0 0.0
        %938 = vmatprep.subr.mxu0 0.0
        %939 = vmatpush1.msra.mxu0 0.0
        %940 = vmatprep.subr.mxu0 0.0
        %941 = vmatpush1.msra.mxu0 0.0
        %942 = vmatprep.subr.mxu0 0.0
        %943 = vmatpush1.msra.mxu0 0.0
        %944 = vmatprep.subr.mxu0 0.0
        %945 = vmatpush1.msra.mxu0 0.0
        %946 = vmatprep.subr.mxu0 0.0
        %947 = vmatpush1.msra.mxu0 0.0
        %948 = vmatprep.subr.mxu0 0.0
        %949 = vmatpush1.msra.mxu0 0.0
        %950 = vmatprep.subr.mxu0 0.0
        %951 = vmatpush1.msra.mxu0 0.0
        %952 = vmatprep.subr.mxu0 0.0
        %953 = vmatpush1.msra.mxu0 0.0
        %954 = vmatprep.subr.mxu0 0.0
        %955 = vmatpush1.msra.mxu0 0.0
        %956 = vmatprep.subr.mxu0 0.0
        %957 = vmatpush1.msra.mxu0 0.0
        %958 = vmatprep.subr.mxu0 0.0
        %959 = vmatpush1.msra.mxu0 0.0
        %960 = vmatprep.subr.mxu0 0.0
        %961 = vmatpush1.msra.mxu0 0.0
        %962 = vmatprep.subr.mxu0 0.0
        %963 = vmatpush1.msra.mxu0 0.0
        %964 = vmatprep.mubr.f32.mxu0 0.0
        %965 = vmatmul.mubr.f32.gmra.mrb[0].mxu0 %v427
        %v966 = vpop.f32.mrb[0].mxu0
        %v967 = vadd.f32 %v823, %v966
        %v968 = vpop.f32.mrb[0].mxu0
        %969 = vmatprep.mubr.f32.mxu0 0.0
        %970 = vmatmul.mubr.f32.gmra.mrb[0].mxu0 %v428
        %v971 = vpop.f32.mrb[0].mxu0
        %v972 = vadd.f32 %v828, %v971
        %v973 = vpop.f32.mrb[0].mxu0
        %974 = vmatprep.mubr.f32.mxu0 0.0
        %975 = vmatmul.mubr.f32.gmra.mrb[0].mxu0 %v429
        %v976 = vpop.f32.mrb[0].mxu0
        %v977 = vadd.f32 %v833, %v976
        %v978 = vpop.f32.mrb[0].mxu0
        %979 = vmatprep.mubr.f32.mxu0 0.0
        %980 = vmatmul.mubr.f32.gmra.mrb[0].mxu0 %v430
        %v981 = vpop.f32.mrb[0].mxu0
        %v982 = vadd.f32 %v838, %v981
        %v983 = vpop.f32.mrb[0].mxu0
        %984 = vmatprep.mubr.f32.mxu0 0.0
        %985 = vmatmul.mubr.f32.gmra.mrb[0].mxu0 %v431
        %v986 = vpop.f32.mrb[0].mxu0
        %v987 = vadd.f32 %v843, %v986
        %v988 = vpop.f32.mrb[0].mxu0
        %989 = vmatprep.mubr.f32.mxu0 0.0
        %990 = vmatmul.mubr.f32.gmra.mrb[0].mxu0 %v432
        %v991 = vpop.f32.mrb[0].mxu0
        %v992 = vadd.f32 %v848, %v991
        %v993 = vpop.f32.mrb[0].mxu0
        %994 = vmatprep.mubr.f32.mxu0 0.0
        %995 = vmatmul.mubr.f32.gmra.mrb[0].mxu0 %v433
        %v996 = vpop.f32.mrb[0].mxu0
        %v997 = vadd.f32 %v853, %v996
        %v998 = vpop.f32.mrb[0].mxu0
        %999 = vmatprep.mubr.f32.mxu0 0.0
        %1000 = vmatmul.mubr.f32.gmra.mrb[0].mxu0 %v434
        %v1001 = vpop.f32.mrb[0].mxu0
        %v1002 = vadd.f32 %v858, %v1001
        %v1003 = vpop.f32.mrb[0].mxu0
        %1004 = vmatprep.mubr.f32.mxu0 0.0
        %1005 = vmatmul.mubr.f32.gmra.mrb[0].mxu0 %v435
        %v1006 = vpop.f32.mrb[0].mxu0
        %v1007 = vadd.f32 %v863, %v1006
        %v1008 = vpop.f32.mrb[0].mxu0
        %1009 = vmatprep.mubr.f32.mxu0 0.0
        %1010 = vmatmul.mubr.f32.gmra.mrb[0].mxu0 %v436
        %v1011 = vpop.f32.mrb[0].mxu0
        %v1012 = vadd.f32 %v868, %v1011
        %v1013 = vpop.f32.mrb[0].mxu0
        %1014 = vmatprep.mubr.f32.mxu0 0.0
        %1015 = vmatmul.mubr.f32.gmra.mrb[0].mxu0 %v437
        %v1016 = vpop.f32.mrb[0].mxu0
        %v1017 = vadd.f32 %v873, %v1016
        %v1018 = vpop.f32.mrb[0].mxu0
        %1019 = vmatprep.mubr.f32.mxu0 0.0
        %1020 = vmatmul.mubr.f32.gmra.mrb[0].mxu0 %v438
        %v1021 = vpop.f32.mrb[0].mxu0
        %v1022 = vadd.f32 %v878, %v1021
        %v1023 = vpop.f32.mrb[0].mxu0
        %1024 = vmatprep.mubr.f32.mxu0 0.0
        %1025 = vmatmul.mubr.f32.gmra.mrb[0].mxu0 %v439
        %v1026 = vpop.f32.mrb[0].mxu0
        %v1027 = vadd.f32 %v883, %v1026
        %v1028 = vpop.f32.mrb[0].mxu0
        %1029 = vmatprep.mubr.f32.mxu0 0.0
        %1030 = vmatmul.mubr.f32.gmra.mrb[0].mxu0 %v440
        %v1031 = vpop.f32.mrb[0].mxu0
        %v1032 = vadd.f32 %v888, %v1031
        %v1033 = vpop.f32.mrb[0].mxu0
        %1034 = vmatprep.mubr.f32.mxu0 0.0
        %1035 = vmatmul.mubr.f32.gmra.mrb[0].mxu0 %v441
        %v1036 = vpop.f32.mrb[0].mxu0
        %v1037 = vadd.f32 %v893, %v1036
        %v1038 = vpop.f32.mrb[0].mxu0
        %1039 = vmatprep.mubr.f32.mxu0 0.0
        %1040 = vmatmul.mubr.f32.gmra.mrb[0].mxu0 %v442
        %v1041 = vpop.f32.mrb[0].mxu0
        %v1042 = vadd.f32 %v898, %v1041
        %v1043 = vpop.f32.mrb[0].mxu0
        %1044 = vdwg.mxu0
        %v1045 = vtanh.pop %v967
        %v1046 = vtanh.pop %v972
        %v1047 = vtanh.pop %v977
        %v1048 = vtanh.pop %v982
        %v1049 = vtanh.pop %v987
        %v1050 = vtanh.pop %v992
        %v1051 = vtanh.pop %v997
        %v1052 = vtanh.pop %v1002
        %v1053 = vtanh.pop %v1007
        %v1054 = vtanh.pop %v1012
        %v1055 = vtanh.pop %v1017
        %v1056 = vtanh.pop %v1022
        %v1057 = vtanh.pop %v1027
        %v1058 = vtanh.pop %v1032
        %v1059 = vtanh.pop %v1037
        %v1060 = vtanh.pop %v1042
        %1062 = vset.pattern.permute.xlu0 0
        %1063 = vperm.xlu0 %1062, %v496
        %v1064 = vpop.permute.xlu0 %1063
        %1067 = vset.pattern.permute.xlu0 0
        %1068 = vperm.xlu0 %1067, %v497
        %v1069 = vpop.permute.xlu0 %1068
        %1072 = vset.pattern.permute.xlu0 0
        %1073 = vperm.xlu0 %1072, %v498
        %v1074 = vpop.permute.xlu0 %1073
        %1077 = vset.pattern.permute.xlu0 0
        %1078 = vperm.xlu0 %1077, %v499
        %v1079 = vpop.permute.xlu0 %1078
        %1082 = vset.pattern.permute.xlu0 0
        %1083 = vperm.xlu0 %1082, %v500
        %v1084 = vpop.permute.xlu0 %1083
        %1087 = vset.pattern.permute.xlu0 0
        %1088 = vperm.xlu0 %1087, %v501
        %v1089 = vpop.permute.xlu0 %1088
        %1092 = vset.pattern.permute.xlu0 0
        %1093 = vperm.xlu0 %1092, %v502
        %v1094 = vpop.permute.xlu0 %1093
        %1097 = vset.pattern.permute.xlu0 0
        %1098 = vperm.xlu0 %1097, %v503
        %v1099 = vpop.permute.xlu0 %1098
        %1102 = vset.pattern.permute.xlu0 0
        %1103 = vperm.xlu0 %1102, %v504
        %v1104 = vpop.permute.xlu0 %1103
        %1107 = vset.pattern.permute.xlu0 0
        %1108 = vperm.xlu0 %1107, %v505
        %v1109 = vpop.permute.xlu0 %1108
        %1112 = vset.pattern.permute.xlu0 0
        %1113 = vperm.xlu0 %1112, %v506
        %v1114 = vpop.permute.xlu0 %1113
        %1117 = vset.pattern.permute.xlu0 0
        %1118 = vperm.xlu0 %1117, %v507
        %v1119 = vpop.permute.xlu0 %1118
        %1122 = vset.pattern.permute.xlu0 0
        %1123 = vperm.xlu0 %1122, %v508
        %v1124 = vpop.permute.xlu0 %1123
        %1127 = vset.pattern.permute.xlu0 0
        %1128 = vperm.xlu0 %1127, %v509
        %v1129 = vpop.permute.xlu0 %1128
        %1132 = vset.pattern.permute.xlu0 0
        %1133 = vperm.xlu0 %1132, %v510
        %v1134 = vpop.permute.xlu0 %1133
        %1137 = vset.pattern.permute.xlu0 0
        %1138 = vperm.xlu0 %1137, %v511
        %v1139 = vpop.permute.xlu0 %1138
        %1141 = vmatprep.subr.mxu0 0.0
        %1142 = vmatpush1.msra.mxu0 %v1045
        %1143 = vmatprep.subr.mxu0 0.0
        %1144 = vmatpush1.msra.mxu0 %v1046
        %1145 = vmatprep.subr.mxu0 0.0
        %1146 = vmatpush1.msra.mxu0 %v1047
        %1147 = vmatprep.subr.mxu0 0.0
        %1148 = vmatpush1.msra.mxu0 %v1048
        %1149 = vmatprep.subr.mxu0 0.0
        %1150 = vmatpush1.msra.mxu0 %v1049
        %1151 = vmatprep.subr.mxu0 0.0
        %1152 = vmatpush1.msra.mxu0 %v1050
        %1153 = vmatprep.subr.mxu0 0.0
        %1154 = vmatpush1.msra.mxu0 %v1051
        %1155 = vmatprep.subr.mxu0 0.0
        %1156 = vmatpush1.msra.mxu0 %v1052
        %1157 = vmatprep.subr.mxu0 0.0
        %1158 = vmatpush1.msra.mxu0 %v1053
        %1159 = vmatprep.subr.mxu0 0.0
        %1160 = vmatpush1.msra.mxu0 %v1054
        %1161 = vmatprep.subr.mxu0 0.0
        %1162 = vmatpush1.msra.mxu0 %v1055
        %1163 = vmatprep.subr.mxu0 0.0
        %1164 = vmatpush1.msra.mxu0 %v1056
        %1165 = vmatprep.subr.mxu0 0.0
        %1166 = vmatpush1.msra.mxu0 %v1057
        %1167 = vmatprep.subr.mxu0 0.0
        %1168 = vmatpush1.msra.mxu0 %v1058
        %1169 = vmatprep.subr.mxu0 0.0
        %1170 = vmatpush1.msra.mxu0 %v1059
        %1171 = vmatprep.subr.mxu0 0.0
        %1172 = vmatpush1.msra.mxu0 %v1060
        %1173 = vmatprep.subr.mxu0 0.0
        %1174 = vmatpush1.msra.mxu0 0.0
        %1175 = vmatprep.subr.mxu0 0.0
        %1176 = vmatpush1.msra.mxu0 0.0
        %1177 = vmatprep.subr.mxu0 0.0
        %1178 = vmatpush1.msra.mxu0 0.0
        %1179 = vmatprep.subr.mxu0 0.0
        %1180 = vmatpush1.msra.mxu0 0.0
        %1181 = vmatprep.subr.mxu0 0.0
        %1182 = vmatpush1.msra.mxu0 0.0
        %1183 = vmatprep.subr.mxu0 0.0
        %1184 = vmatpush1.msra.mxu0 0.0
        %1185 = vmatprep.subr.mxu0 0.0
        %1186 = vmatpush1.msra.mxu0 0.0
        %1187 = vmatprep.subr.mxu0 0.0
        %1188 = vmatpush1.msra.mxu0 0.0
        %1189 = vmatprep.subr.mxu0 0.0
        %1190 = vmatpush1.msra.mxu0 0.0
        %1191 = vmatprep.subr.mxu0 0.0
        %1192 = vmatpush1.msra.mxu0 0.0
        %1193 = vmatprep.subr.mxu0 0.0
        %1194 = vmatpush1.msra.mxu0 0.0
        %1195 = vmatprep.subr.mxu0 0.0
        %1196 = vmatpush1.msra.mxu0 0.0
        %1197 = vmatprep.subr.mxu0 0.0
        %1198 = vmatpush1.msra.mxu0 0.0
        %1199 = vmatprep.subr.mxu0 0.0
        %1200 = vmatpush1.msra.mxu0 0.0
        %1201 = vmatprep.subr.mxu0 0.0
        %1202 = vmatpush1.msra.mxu0 0.0
        %1203 = vmatprep.subr.mxu0 0.0
        %1204 = vmatpush1.msra.mxu0 0.0
        %1205 = vmatprep.mubr.f32.mxu0 0.0
        %1206 = vmatmul.mubr.f32.gmra.mrb[0].mxu0 %v444
        %v1207 = vpop.f32.mrb[0].mxu0
        %v1208 = vadd.f32 %v1064, %v1207
        %v1209 = vpop.f32.mrb[0].mxu0
        %1210 = vmatprep.mubr.f32.mxu0 0.0
        %1211 = vmatmul.mubr.f32.gmra.mrb[0].mxu0 %v445
        %v1212 = vpop.f32.mrb[0].mxu0
        %v1213 = vadd.f32 %v1069, %v1212
        %v1214 = vpop.f32.mrb[0].mxu0
        %1215 = vmatprep.mubr.f32.mxu0 0.0
        %1216 = vmatmul.mubr.f32.gmra.mrb[0].mxu0 %v446
        %v1217 = vpop.f32.mrb[0].mxu0
        %v1218 = vadd.f32 %v1074, %v1217
        %v1219 = vpop.f32.mrb[0].mxu0
        %1220 = vmatprep.mubr.f32.mxu0 0.0
        %1221 = vmatmul.mubr.f32.gmra.mrb[0].mxu0 %v447
        %v1222 = vpop.f32.mrb[0].mxu0
        %v1223 = vadd.f32 %v1079, %v1222
        %v1224 = vpop.f32.mrb[0].mxu0
        %1225 = vmatprep.mubr.f32.mxu0 0.0
        %1226 = vmatmul.mubr.f32.gmra.mrb[0].mxu0 %v448
        %v1227 = vpop.f32.mrb[0].mxu0
        %v1228 = vadd.f32 %v1084, %v1227
        %v1229 = vpop.f32.mrb[0].mxu0
        %1230 = vmatprep.mubr.f32.mxu0 0.0
        %1231 = vmatmul.mubr.f32.gmra.mrb[0].mxu0 %v449
        %v1232 = vpop.f32.mrb[0].mxu0
        %v1233 = vadd.f32 %v1089, %v1232
        %v1234 = vpop.f32.mrb[0].mxu0
        %1235 = vmatprep.mubr.f32.mxu0 0.0
        %1236 = vmatmul.mubr.f32.gmra.mrb[0].mxu0 %v450
        %v1237 = vpop.f32.mrb[0].mxu0
        %v1238 = vadd.f32 %v1094, %v1237
        %v1239 = vpop.f32.mrb[0].mxu0
        %1240 = vmatprep.mubr.f32.mxu0 0.0
        %1241 = vmatmul.mubr.f32.gmra.mrb[0].mxu0 %v451
        %v1242 = vpop.f32.mrb[0].mxu0
        %v1243 = vadd.f32 %v1099, %v1242
        %v1244 = vpop.f32.mrb[0].mxu0
        %1245 = vmatprep.mubr.f32.mxu0 0.0
        %1246 = vmatmul.mubr.f32.gmra.mrb[0].mxu0 %v452
        %v1247 = vpop.f32.mrb[0].mxu0
        %v1248 = vadd.f32 %v1104, %v1247
        %v1249 = vpop.f32.mrb[0].mxu0
        %1250 = vmatprep.mubr.f32.mxu0 0.0
        %1251 = vmatmul.mubr.f32.gmra.mrb[0].mxu0 %v453
        %v1252 = vpop.f32.mrb[0].mxu0
        %v1253 = vadd.f32 %v1109, %v1252
        %v1254 = vpop.f32.mrb[0].mxu0
        %1255 = vmatprep.mubr.f32.mxu0 0.0
        %1256 = vmatmul.mubr.f32.gmra.mrb[0].mxu0 %v454
        %v1257 = vpop.f32.mrb[0].mxu0
        %v1258 = vadd.f32 %v1114, %v1257
        %v1259 = vpop.f32.mrb[0].mxu0
        %1260 = vmatprep.mubr.f32.mxu0 0.0
        %1261 = vmatmul.mubr.f32.gmra.mrb[0].mxu0 %v455
        %v1262 = vpop.f32.mrb[0].mxu0
        %v1263 = vadd.f32 %v1119, %v1262
        %v1264 = vpop.f32.mrb[0].mxu0
        %1265 = vmatprep.mubr.f32.mxu0 0.0
        %1266 = vmatmul.mubr.f32.gmra.mrb[0].mxu0 %v456
        %v1267 = vpop.f32.mrb[0].mxu0
        %v1268 = vadd.f32 %v1124, %v1267
        %v1269 = vpop.f32.mrb[0].mxu0
        %1270 = vmatprep.mubr.f32.mxu0 0.0
        %1271 = vmatmul.mubr.f32.gmra.mrb[0].mxu0 %v457
        %v1272 = vpop.f32.mrb[0].mxu0
        %v1273 = vadd.f32 %v1129, %v1272
        %v1274 = vpop.f32.mrb[0].mxu0
        %1275 = vmatprep.mubr.f32.mxu0 0.0
        %1276 = vmatmul.mubr.f32.gmra.mrb[0].mxu0 %v458
        %v1277 = vpop.f32.mrb[0].mxu0
        %v1278 = vadd.f32 %v1134, %v1277
        %v1279 = vpop.f32.mrb[0].mxu0
        %1280 = vmatprep.mubr.f32.mxu0 0.0
        %1281 = vmatmul.mubr.f32.gmra.mrb[0].mxu0 %v459
        %v1282 = vpop.f32.mrb[0].mxu0
        %v1283 = vadd.f32 %v1139, %v1282
        %v1284 = vpop.f32.mrb[0].mxu0
        %1285 = vdwg.mxu0
        %v1286 = vtanh.pop %v1208
        %v1287 = vtanh.pop %v1213
        %v1288 = vtanh.pop %v1218
        %v1289 = vtanh.pop %v1223
        %v1290 = vtanh.pop %v1228
        %v1291 = vtanh.pop %v1233
        %v1292 = vtanh.pop %v1238
        %v1293 = vtanh.pop %v1243
        %v1294 = vtanh.pop %v1248
        %v1295 = vtanh.pop %v1253
        %v1296 = vtanh.pop %v1258
        %v1297 = vtanh.pop %v1263
        %v1298 = vtanh.pop %v1268
        %v1299 = vtanh.pop %v1273
        %v1300 = vtanh.pop %v1278
        %v1301 = vtanh.pop %v1283
        %1303 = vset.pattern.permute.xlu0 0
        %1304 = vperm.xlu0 %1303, %v513
        %v1305 = vpop.permute.xlu0 %1304
        %1308 = vset.pattern.permute.xlu0 0
        %1309 = vperm.xlu0 %1308, %v514
        %v1310 = vpop.permute.xlu0 %1309
        %1313 = vset.pattern.permute.xlu0 0
        %1314 = vperm.xlu0 %1313, %v515
        %v1315 = vpop.permute.xlu0 %1314
        %1318 = vset.pattern.permute.xlu0 0
        %1319 = vperm.xlu0 %1318, %v516
        %v1320 = vpop.permute.xlu0 %1319
        %1323 = vset.pattern.permute.xlu0 0
        %1324 = vperm.xlu0 %1323, %v517
        %v1325 = vpop.permute.xlu0 %1324
        %1328 = vset.pattern.permute.xlu0 0
        %1329 = vperm.xlu0 %1328, %v518
        %v1330 = vpop.permute.xlu0 %1329
        %1333 = vset.pattern.permute.xlu0 0
        %1334 = vperm.xlu0 %1333, %v519
        %v1335 = vpop.permute.xlu0 %1334
        %1338 = vset.pattern.permute.xlu0 0
        %1339 = vperm.xlu0 %1338, %v520
        %v1340 = vpop.permute.xlu0 %1339
        %1343 = vset.pattern.permute.xlu0 0
        %1344 = vperm.xlu0 %1343, %v521
        %v1345 = vpop.permute.xlu0 %1344
        %1348 = vset.pattern.permute.xlu0 0
        %1349 = vperm.xlu0 %1348, %v522
        %v1350 = vpop.permute.xlu0 %1349
        %1353 = vset.pattern.permute.xlu0 0
        %1354 = vperm.xlu0 %1353, %v523
        %v1355 = vpop.permute.xlu0 %1354
        %1358 = vset.pattern.permute.xlu0 0
        %1359 = vperm.xlu0 %1358, %v524
        %v1360 = vpop.permute.xlu0 %1359
        %1363 = vset.pattern.permute.xlu0 0
        %1364 = vperm.xlu0 %1363, %v525
        %v1365 = vpop.permute.xlu0 %1364
        %1368 = vset.pattern.permute.xlu0 0
        %1369 = vperm.xlu0 %1368, %v526
        %v1370 = vpop.permute.xlu0 %1369
        %1373 = vset.pattern.permute.xlu0 0
        %1374 = vperm.xlu0 %1373, %v527
        %v1375 = vpop.permute.xlu0 %1374
        %1378 = vset.pattern.permute.xlu0 0
        %1379 = vperm.xlu0 %1378, %v528
        %v1380 = vpop.permute.xlu0 %1379
        %1382 = vmatprep.subr.mxu0 0.0
        %1383 = vmatpush1.msra.mxu0 %v1286
        %1384 = vmatprep.subr.mxu0 0.0
        %1385 = vmatpush1.msra.mxu0 %v1287
        %1386 = vmatprep.subr.mxu0 0.0
        %1387 = vmatpush1.msra.mxu0 %v1288
        %1388 = vmatprep.subr.mxu0 0.0
        %1389 = vmatpush1.msra.mxu0 %v1289
        %1390 = vmatprep.subr.mxu0 0.0
        %1391 = vmatpush1.msra.mxu0 %v1290
        %1392 = vmatprep.subr.mxu0 0.0
        %1393 = vmatpush1.msra.mxu0 %v1291
        %1394 = vmatprep.subr.mxu0 0.0
        %1395 = vmatpush1.msra.mxu0 %v1292
        %1396 = vmatprep.subr.mxu0 0.0
        %1397 = vmatpush1.msra.mxu0 %v1293
        %1398 = vmatprep.subr.mxu0 0.0
        %1399 = vmatpush1.msra.mxu0 %v1294
        %1400 = vmatprep.subr.mxu0 0.0
        %1401 = vmatpush1.msra.mxu0 %v1295
        %1402 = vmatprep.subr.mxu0 0.0
        %1403 = vmatpush1.msra.mxu0 %v1296
        %1404 = vmatprep.subr.mxu0 0.0
        %1405 = vmatpush1.msra.mxu0 %v1297
        %1406 = vmatprep.subr.mxu0 0.0
        %1407 = vmatpush1.msra.mxu0 %v1298
        %1408 = vmatprep.subr.mxu0 0.0
        %1409 = vmatpush1.msra.mxu0 %v1299
        %1410 = vmatprep.subr.mxu0 0.0
        %1411 = vmatpush1.msra.mxu0 %v1300
        %1412 = vmatprep.subr.mxu0 0.0
        %1413 = vmatpush1.msra.mxu0 %v1301
        %1414 = vmatprep.subr.mxu0 0.0
        %1415 = vmatpush1.msra.mxu0 0.0
        %1416 = vmatprep.subr.mxu0 0.0
        %1417 = vmatpush1.msra.mxu0 0.0
        %1418 = vmatprep.subr.mxu0 0.0
        %1419 = vmatpush1.msra.mxu0 0.0
        %1420 = vmatprep.subr.mxu0 0.0
        %1421 = vmatpush1.msra.mxu0 0.0
        %1422 = vmatprep.subr.mxu0 0.0
        %1423 = vmatpush1.msra.mxu0 0.0
        %1424 = vmatprep.subr.mxu0 0.0
        %1425 = vmatpush1.msra.mxu0 0.0
        %1426 = vmatprep.subr.mxu0 0.0
        %1427 = vmatpush1.msra.mxu0 0.0
        %1428 = vmatprep.subr.mxu0 0.0
        %1429 = vmatpush1.msra.mxu0 0.0
        %1430 = vmatprep.subr.mxu0 0.0
        %1431 = vmatpush1.msra.mxu0 0.0
        %1432 = vmatprep.subr.mxu0 0.0
        %1433 = vmatpush1.msra.mxu0 0.0
        %1434 = vmatprep.subr.mxu0 0.0
        %1435 = vmatpush1.msra.mxu0 0.0
        %1436 = vmatprep.subr.mxu0 0.0
        %1437 = vmatpush1.msra.mxu0 0.0
        %1438 = vmatprep.subr.mxu0 0.0
        %1439 = vmatpush1.msra.mxu0 0.0
        %1440 = vmatprep.subr.mxu0 0.0
        %1441 = vmatpush1.msra.mxu0 0.0
        %1442 = vmatprep.subr.mxu0 0.0
        %1443 = vmatpush1.msra.mxu0 0.0
        %1444 = vmatprep.subr.mxu0 0.0
        %1445 = vmatpush1.msra.mxu0 0.0
        %1446 = vmatprep.mubr.f32.mxu0 0.0
        %1447 = vmatmul.mubr.f32.gmra.mrb[0].mxu0 %v461
        %v1448 = vpop.f32.mrb[0].mxu0
        %v1449 = vadd.f32 %v1305, %v1448
        %v1450 = vpop.f32.mrb[0].mxu0
        %1451 = vmatprep.mubr.f32.mxu0 0.0
        %1452 = vmatmul.mubr.f32.gmra.mrb[0].mxu0 %v462
        %v1453 = vpop.f32.mrb[0].mxu0
        %v1454 = vadd.f32 %v1310, %v1453
        %v1455 = vpop.f32.mrb[0].mxu0
        %1456 = vmatprep.mubr.f32.mxu0 0.0
        %1457 = vmatmul.mubr.f32.gmra.mrb[0].mxu0 %v463
        %v1458 = vpop.f32.mrb[0].mxu0
        %v1459 = vadd.f32 %v1315, %v1458
        %v1460 = vpop.f32.mrb[0].mxu0
        %1461 = vmatprep.mubr.f32.mxu0 0.0
        %1462 = vmatmul.mubr.f32.gmra.mrb[0].mxu0 %v464
        %v1463 = vpop.f32.mrb[0].mxu0
        %v1464 = vadd.f32 %v1320, %v1463
        %v1465 = vpop.f32.mrb[0].mxu0
        %1466 = vmatprep.mubr.f32.mxu0 0.0
        %1467 = vmatmul.mubr.f32.gmra.mrb[0].mxu0 %v465
        %v1468 = vpop.f32.mrb[0].mxu0
        %v1469 = vadd.f32 %v1325, %v1468
        %v1470 = vpop.f32.mrb[0].mxu0
        %1471 = vmatprep.mubr.f32.mxu0 0.0
        %1472 = vmatmul.mubr.f32.gmra.mrb[0].mxu0 %v466
        %v1473 = vpop.f32.mrb[0].mxu0
        %v1474 = vadd.f32 %v1330, %v1473
        %v1475 = vpop.f32.mrb[0].mxu0
        %1476 = vmatprep.mubr.f32.mxu0 0.0
        %1477 = vmatmul.mubr.f32.gmra.mrb[0].mxu0 %v467
        %v1478 = vpop.f32.mrb[0].mxu0
        %v1479 = vadd.f32 %v1335, %v1478
        %v1480 = vpop.f32.mrb[0].mxu0
        %1481 = vmatprep.mubr.f32.mxu0 0.0
        %1482 = vmatmul.mubr.f32.gmra.mrb[0].mxu0 %v468
        %v1483 = vpop.f32.mrb[0].mxu0
        %v1484 = vadd.f32 %v1340, %v1483
        %v1485 = vpop.f32.mrb[0].mxu0
        %1486 = vmatprep.mubr.f32.mxu0 0.0
        %1487 = vmatmul.mubr.f32.gmra.mrb[0].mxu0 %v469
        %v1488 = vpop.f32.mrb[0].mxu0
        %v1489 = vadd.f32 %v1345, %v1488
        %v1490 = vpop.f32.mrb[0].mxu0
        %1491 = vmatprep.mubr.f32.mxu0 0.0
        %1492 = vmatmul.mubr.f32.gmra.mrb[0].mxu0 %v470
        %v1493 = vpop.f32.mrb[0].mxu0
        %v1494 = vadd.f32 %v1350, %v1493
        %v1495 = vpop.f32.mrb[0].mxu0
        %1496 = vmatprep.mubr.f32.mxu0 0.0
        %1497 = vmatmul.mubr.f32.gmra.mrb[0].mxu0 %v471
        %v1498 = vpop.f32.mrb[0].mxu0
        %v1499 = vadd.f32 %v1355, %v1498
        %v1500 = vpop.f32.mrb[0].mxu0
        %1501 = vmatprep.mubr.f32.mxu0 0.0
        %1502 = vmatmul.mubr.f32.gmra.mrb[0].mxu0 %v472
        %v1503 = vpop.f32.mrb[0].mxu0
        %v1504 = vadd.f32 %v1360, %v1503
        %v1505 = vpop.f32.mrb[0].mxu0
        %1506 = vmatprep.mubr.f32.mxu0 0.0
        %1507 = vmatmul.mubr.f32.gmra.mrb[0].mxu0 %v473
        %v1508 = vpop.f32.mrb[0].mxu0
        %v1509 = vadd.f32 %v1365, %v1508
        %v1510 = vpop.f32.mrb[0].mxu0
        %1511 = vmatprep.mubr.f32.mxu0 0.0
        %1512 = vmatmul.mubr.f32.gmra.mrb[0].mxu0 %v474
        %v1513 = vpop.f32.mrb[0].mxu0
        %v1514 = vadd.f32 %v1370, %v1513
        %v1515 = vpop.f32.mrb[0].mxu0
        %1516 = vmatprep.mubr.f32.mxu0 0.0
        %1517 = vmatmul.mubr.f32.gmra.mrb[0].mxu0 %v475
        %v1518 = vpop.f32.mrb[0].mxu0
        %v1519 = vadd.f32 %v1375, %v1518
        %v1520 = vpop.f32.mrb[0].mxu0
        %1521 = vmatprep.mubr.f32.mxu0 0.0
        %1522 = vmatmul.mubr.f32.gmra.mrb[0].mxu0 %v476
        %v1523 = vpop.f32.mrb[0].mxu0
        %v1524 = vadd.f32 %v1380, %v1523
        %v1525 = vpop.f32.mrb[0].mxu0
        %1526 = vdwg.mxu0
        %v1527 = vtanh.pop %v1449
        %v1528 = vtanh.pop %v1454
        %v1529 = vtanh.pop %v1459
        %v1530 = vtanh.pop %v1464
        %v1531 = vtanh.pop %v1469
        %v1532 = vtanh.pop %v1474
        %v1533 = vtanh.pop %v1479
        %v1534 = vtanh.pop %v1484
        %v1535 = vtanh.pop %v1489
        %v1536 = vtanh.pop %v1494
        %v1537 = vtanh.pop %v1499
        %v1538 = vtanh.pop %v1504
        %v1539 = vtanh.pop %v1509
        %v1540 = vtanh.pop %v1514
        %v1541 = vtanh.pop %v1519
        %v1542 = vtanh.pop %v1524
        %1544 = vset.pattern.permute.xlu0 0
        %1545 = vperm.xlu0 %1544, %v529
        %v1546 = vpop.permute.xlu0 %1545
        %1549 = vset.pattern.permute.xlu0 0
        %1550 = vperm.xlu0 %1549, %v530
        %v1551 = vpop.permute.xlu0 %1550
        %1553 = vmatprep.subr.mxu0 0.0
        %1554 = vmatpush1.msra.mxu0 %v1527
        %1555 = vmatprep.subr.mxu0 0.0
        %1556 = vmatpush1.msra.mxu0 %v1528
        %1557 = vmatprep.subr.mxu0 0.0
        %1558 = vmatpush1.msra.mxu0 %v1529
        %1559 = vmatprep.subr.mxu0 0.0
        %1560 = vmatpush1.msra.mxu0 %v1530
        %1561 = vmatprep.subr.mxu0 0.0
        %1562 = vmatpush1.msra.mxu0 %v1531
        %1563 = vmatprep.subr.mxu0 0.0
        %1564 = vmatpush1.msra.mxu0 %v1532
        %1565 = vmatprep.subr.mxu0 0.0
        %1566 = vmatpush1.msra.mxu0 %v1533
        %1567 = vmatprep.subr.mxu0 0.0
        %1568 = vmatpush1.msra.mxu0 %v1534
        %1569 = vmatprep.subr.mxu0 0.0
        %1570 = vmatpush1.msra.mxu0 %v1535
        %1571 = vmatprep.subr.mxu0 0.0
        %1572 = vmatpush1.msra.mxu0 %v1536
        %1573 = vmatprep.subr.mxu0 0.0
        %1574 = vmatpush1.msra.mxu0 %v1537
        %1575 = vmatprep.subr.mxu0 0.0
        %1576 = vmatpush1.msra.mxu0 %v1538
        %1577 = vmatprep.subr.mxu0 0.0
        %1578 = vmatpush1.msra.mxu0 %v1539
        %1579 = vmatprep.subr.mxu0 0.0
        %1580 = vmatpush1.msra.mxu0 %v1540
        %1581 = vmatprep.subr.mxu0 0.0
        %1582 = vmatpush1.msra.mxu0 %v1541
        %1583 = vmatprep.subr.mxu0 0.0
        %1584 = vmatpush1.msra.mxu0 %v1542
        %1585 = vmatprep.subr.mxu0 0.0
        %1586 = vmatpush1.msra.mxu0 0.0
        %1587 = vmatprep.subr.mxu0 0.0
        %1588 = vmatpush1.msra.mxu0 0.0
        %1589 = vmatprep.subr.mxu0 0.0
        %1590 = vmatpush1.msra.mxu0 0.0
        %1591 = vmatprep.subr.mxu0 0.0
        %1592 = vmatpush1.msra.mxu0 0.0
        %1593 = vmatprep.subr.mxu0 0.0
        %1594 = vmatpush1.msra.mxu0 0.0
        %1595 = vmatprep.subr.mxu0 0.0
        %1596 = vmatpush1.msra.mxu0 0.0
        %1597 = vmatprep.subr.mxu0 0.0
        %1598 = vmatpush1.msra.mxu0 0.0
        %1599 = vmatprep.subr.mxu0 0.0
        %1600 = vmatpush1.msra.mxu0 0.0
        %1601 = vmatprep.subr.mxu0 0.0
        %1602 = vmatpush1.msra.mxu0 0.0
        %1603 = vmatprep.subr.mxu0 0.0
        %1604 = vmatpush1.msra.mxu0 0.0
        %1605 = vmatprep.subr.mxu0 0.0
        %1606 = vmatpush1.msra.mxu0 0.0
        %1607 = vmatprep.subr.mxu0 0.0
        %1608 = vmatpush1.msra.mxu0 0.0
        %1609 = vmatprep.subr.mxu0 0.0
        %1610 = vmatpush1.msra.mxu0 0.0
        %1611 = vmatprep.subr.mxu0 0.0
        %1612 = vmatpush1.msra.mxu0 0.0
        %1613 = vmatprep.subr.mxu0 0.0
        %1614 = vmatpush1.msra.mxu0 0.0
        %1615 = vmatprep.subr.mxu0 0.0
        %1616 = vmatpush1.msra.mxu0 0.0
        %1617 = vmatprep.mubr.f32.mxu0 0.0
        %1618 = vmatmul.mubr.f32.gmra.mrb[0].mxu0 %v477
        %v1619 = vpop.f32.mrb[0].mxu0
        %v1620 = vadd.f32 %v1546, %v1619
        %v1621 = vpop.f32.mrb[0].mxu0
        %1622 = vmatprep.mubr.f32.mxu0 0.0
        %1623 = vmatmul.mubr.f32.gmra.mrb[0].mxu0 %v478
        %v1624 = vpop.f32.mrb[0].mxu0
        %v1625 = vadd.f32 %v1551, %v1624
        %v1626 = vpop.f32.mrb[0].mxu0
        %1627 = vdwg.mxu0
        %v1628 = vxor.u32 %v1620, 2147483648
        %v1629 = vxor.u32 %v1625, 2147483648
        %v1630 = vmul.f32 %v1628, 1.442695
        %v1631 = vpow.pop %v1630
        %v1632 = vmul.f32 %v1629, 1.442695
        %v1633 = vpow.pop %v1632
        %v1634 = vadd.f32 %v1631, 1.0
        %v1635 = vadd.f32 %v1633, 1.0
        %v1636 = vrcp.pop %v1634
        %v1637 = vmul.f32 1.0, %v1636
        %v1638 = vrcp.pop %v1635
        %v1639 = vmul.f32 1.0, %v1638
        %vm1640 = vcmask 523264
        %1641 = vst.msk [vmem:[%s322] sm:$0xff] %vm1640, %v1637
        %vm1642 = vcmask 519168
        %1643 = vst.msk [vmem:[%s322 + $0x8] sm:$0xf] %vm1642, %v1639
        %p1644 = scmp.lt.s32.totalorder %s24, 1
        %s1645 = scalar_select %p1644, %s24, 1
        %p1646 = scmp.lt.s32.totalorder %s25, 0
        %s1647 = scalar_select %p1646, %s25, 0
        %s1648 = smul.addr %s1645, 2
        %s1649 = sadd.s32 %s1647, %s1648
        %s1650 = smul.addr %s1649, 8
        %s1651 = scalar_lea.vmem %s7, %s1650
        // Predicated region
        $region57: #{forward.1} parent=47 // pred_check
          %p1652 = pneg %p204
        $region58: #{forward.1} parent=47 // pred_check_branch
          %1654 = sbr.rel (%p1652) target = $region60
        $region59: #{forward.1} parent=47 // pred_region
          _
        $region60: #{forward.1} parent=47 // pred_fallthru
          _
      $region48: #{forward.1} parent=5 // pred_fallthru
        _
      %p1655 = scmp.le.s32.totalorder 2, %s15
      // Predicated region
      $region61: #{forward.1} parent=5 // pred_check
        %p1656 = pneg %p1655
      $region62: #{forward.1} parent=5 // pred_check_branch
        %1658 = sbr.rel (%p1656) target = $region64
      $region63: #{forward.1} parent=5 // pred_region
        %s1659 = ssub.s32 %s15, 2
        // Predicated region
        $region65: #{forward.1} parent=63 // pred_check
          %p1660 = pneg %p210
        $region66: #{forward.1} parent=63 // pred_check_branch
          %1662 = sbr.rel (%p1660) target = $region68
        $region67: #{forward.1} parent=63 // pred_region
          %p1663 = scmp.lt.s32.totalorder %s26, 1
          %s1664 = scalar_select %p1663, %s26, 1
          %p1665 = scmp.lt.s32.totalorder %s27, 0
          %s1666 = scalar_select %p1665, %s27, 0
          %s1667 = smul.addr %s1664, 2
          %s1668 = sadd.s32 %s1666, %s1667
          %s1669 = smul.addr %s1668, 8
          %s1670 = scalar_lea.vmem %s7, %s1669
        $region68: #{forward.1} parent=63 // pred_fallthru
          _
      $region64: #{forward.1} parent=5 // pred_fallthru
        _
    $region6: #{forward.1} parent=1 // loop_footer
      %s19 = sadd.s32 1, %s15
    $region7: #{forward.1} parent=1 // loop_footer_branch
      %14 = sbr.rel target = $region3
    $region8: #{forward.1} parent=1 // loop_exit
      _
    %1671 = vsyncpa [#allocation3], 1
    %s1672 = scalar_lea.sflag [#allocation3], 1
    %1673 = vsyncpa %s1672, 1
    %1674 = vsyncpa [#allocation5], 1

</llo_original>
